<compile_context>
chip_gen: v6e
topology: v6e:2x2x1
jax: 0.10.0
libtpu: 0.0.40
codegen_flags: <defaults>
</compile_context>

<pallas_src>
import functools

import numpy as np

import jax
import jax.numpy as jnp
from jax.experimental import pallas as pl
from jax.experimental.pallas import tpu as pltpu

LANE = 128  # TPU vreg lane width; all feature (last) dims are padded to multiples of this.


def _round_up(x, m):
    return (x + m - 1) // m * m


# ----------------------------------------------------------------------------- fused kernel

def _fused_actor_critic_kernel(
    obs_ref, h_ref,
    convw_ref, convb_ref,
    encw_ref, encb_ref,
    gruw_ref, grub_ref,
    decw_ref, decb_ref,
    headw_ref, headb_ref,
    out_ref, hnew_ref,
    *, hp,
):
    f32 = jnp.float32
    bf16 = jnp.bfloat16

    # --- encoder head: Conv2d (pre-lowered offline to a dense bf16 matmul whose columns are
    #     in torch NCHW-flatten order) + ReLU, then FC + ReLU. bf16 operands, f32 accumulate.
    conv = jnp.dot(obs_ref[...], convw_ref[...], preferred_element_type=f32) + convb_ref[...]
    conv = jnp.maximum(conv, 0.0)
    x = jnp.dot(conv.astype(bf16), encw_ref[...], preferred_element_type=f32) + encb_ref[...]
    x = jnp.maximum(x, 0.0)                                   # [B, hp] f32 (padded lanes 0)

    # --- core: single nn.GRUCell step as ONE fused matmul. Gate blocks along lanes are
    #     [r | z | i_n | h_n], each 128-lane-aligned, so slices below are tile-aligned views.
    h = h_ref[...]                                            # [B, hp] f32 (padded lanes 0)
    xh = jnp.concatenate([x, h], axis=1).astype(bf16)         # [B, 2*hp]
    g = jnp.dot(xh, gruw_ref[...], preferred_element_type=f32) + grub_ref[...]   # [B, 4*hp]
    r = jax.nn.sigmoid(g[:, 0:hp])
    z = jax.nn.sigmoid(g[:, hp:2 * hp])
    n = jnp.tanh(g[:, 2 * hp:3 * hp] + r * g[:, 3 * hp:4 * hp])
    h_new = (1.0 - z) * n + z * h                             # padded lanes stay exactly 0
    hnew_ref[...] = h_new.astype(hnew_ref.dtype)

    # --- tail: decoder + ReLU, then output head (lane-dense padded output, sliced outside).
    dec = jnp.dot(h_new.astype(bf16), decw_ref[...], preferred_element_type=f32) + decb_ref[...]
    dec = jnp.maximum(dec, 0.0)
    out = jnp.dot(dec.astype(bf16), headw_ref[...], preferred_element_type=f32) + headb_ref[...]
    out_ref[...] = out.astype(out_ref.dtype)


# ----------------------------------------------------------------------------- param packing

def init_params(key, *, c_in=4, c_conv=8, k=3, stride=2, hw=16, hidden=32, out_dim=7):
    """Raw (PyTorch-layout-equivalent) parameters for the concrete ActorCritic instance."""
    oh = (hw - k) // stride + 1
    flat = c_conv * oh * oh
    keys = jax.random.split(key, 10)
    s = 0.1
    f32 = jnp.float32
    return {
        "conv_w": s * jax.random.normal(keys[0], (c_conv, c_in, k, k), f32),   # torch Conv2d layout
        "conv_b": s * jax.random.normal(keys[1], (c_conv,), f32),
        "enc_w": s * jax.random.normal(keys[2], (flat, hidden), f32),          # rows: torch NCHW-flatten order
        "enc_b": s * jax.random.normal(keys[3], (hidden,), f32),
        "gru_wih": s * jax.random.normal(keys[4], (hidden, 3 * hidden), f32),  # [in, 3H], gate order (r, z, n)
        "gru_whh": s * jax.random.normal(keys[5], (hidden, 3 * hidden), f32),
        "gru_bih": s * jax.random.normal(keys[6], (3 * hidden,), f32),
        "gru_bhh": s * jax.random.normal(keys[7], (3 * hidden,), f32),
        "dec_w": s * jax.random.normal(keys[8], (hidden, hidden), f32),
        "dec_b": jnp.zeros((hidden,), f32),
        "head_w": s * jax.random.normal(keys[9], (hidden, out_dim), f32),
        "head_b": jnp.zeros((out_dim,), f32),
    }


def conv2d_to_dense(conv_w, conv_b, height, width, stride):
    """Lower a VALID, stride-`stride` Conv2d to an equivalent dense matrix acting on the
    NCHW-flattened input and producing the torch NCHW-flattened output (channel-major).
    One-time offline transform; exact same linear map as the convolution."""
    c_out, c_in, kh, kw = conv_w.shape
    oh = (height - kh) // stride + 1
    ow = (width - kw) // stride + 1
    flat = c_out * oh * ow
    flat_pad = _round_up(flat, LANE)
    co, ci, ki, kj, io, jo = np.meshgrid(
        np.arange(c_out), np.arange(c_in), np.arange(kh), np.arange(kw),
        np.arange(oh), np.arange(ow), indexing="ij")
    rows = (ci * height * width + (io * stride + ki) * width + (jo * stride + kj)).ravel()
    cols = (co * oh * ow + io * ow + jo).ravel()
    vals = conv_w[co.ravel(), ci.ravel(), ki.ravel(), kj.ravel()]
    dense = jnp.zeros((c_in * height * width, flat_pad), conv_w.dtype).at[rows, cols].set(vals)
    bias = jnp.zeros((1, flat_pad), jnp.float32).at[0, :flat].set(jnp.repeat(conv_b, oh * ow))
    return dense, bias, flat, flat_pad


def pack_params(raw, *, hw, stride, hidden, out_dim):
    """One-time offline packing: conv -> dense matmul, lane-pad everything to 128, fuse the
    two GRU weight matrices into one [2*hp, 4*hp] block layout [r | z | i_n | h_n], and cast
    all weights to bf16 (biases stay f32). Padded entries are zero so padded activation lanes
    stay exactly zero through the whole forward pass."""
    f32 = jnp.float32
    bf16 = jnp.bfloat16
    hp = _round_up(hidden, LANE)      # padded hidden width (128)
    op = _round_up(out_dim, LANE)     # padded head width (128)

    conv_dense, conv_bias, flat, flat_pad = conv2d_to_dense(
        raw["conv_w"], raw["conv_b"], hw, hw, stride)

    enc_w = jnp.zeros((flat_pad, hp), f32).at[:flat, :hidden].set(raw["enc_w"])
    enc_b = jnp.zeros((1, hp), f32).at[0, :hidden].set(raw["enc_b"])

    # ---- fused GRU weight: rows = [x (hp) ; h (hp)], cols = [r | z | i_n | h_n] blocks.
    def blk(w):                                   # [hidden, hidden] -> zero-padded [hp, hp]
        return jnp.zeros((hp, hp), f32).at[:hidden, :hidden].set(w)

    wih, whh = raw["gru_wih"], raw["gru_whh"]
    w_ir, w_iz, w_in = wih[:, :hidden], wih[:, hidden:2 * hidden], wih[:, 2 * hidden:]
    w_hr, w_hz, w_hn = whh[:, :hidden], whh[:, hidden:2 * hidden], whh[:, 2 * hidden:]
    zero_blk = jnp.zeros((hp, hp), f32)
    gru_top = jnp.concatenate([blk(w_ir), blk(w_iz), blk(w_in), zero_blk], axis=1)  # x rows
    gru_bot = jnp.concatenate([blk(w_hr), blk(w_hz), zero_blk, blk(w_hn)], axis=1)  # h rows
    gru_w = jnp.concatenate([gru_top, gru_bot], axis=0)                             # [2hp, 4hp]

    b_ir, b_iz, b_in = (raw["gru_bih"][:hidden], raw["gru_bih"][hidden:2 * hidden],
                        raw["gru_bih"][2 * hidden:])
    b_hr, b_hz, b_hn = (raw["gru_bhh"][:hidden], raw["gru_bhh"][hidden:2 * hidden],
                        raw["gru_bhh"][2 * hidden:])

    def padb(b):
        return jnp.zeros((hp,), f32).at[:hidden].set(b)

    gru_b = jnp.concatenate(
        [padb(b_ir + b_hr), padb(b_iz + b_hz), padb(b_in), padb(b_hn)]).reshape(1, 4 * hp)

    dec_w = jnp.zeros((hp, hp), f32).at[:hidden, :hidden].set(raw["dec_w"])
    dec_b = jnp.zeros((1, hp), f32).at[0, :hidden].set(raw["dec_b"])
    head_w = jnp.zeros((hp, op), f32).at[:hidden, :out_dim].set(raw["head_w"])
    head_b = jnp.zeros((1, op), f32).at[0, :out_dim].set(raw["head_b"])

    return {
        "conv_w": conv_dense.astype(bf16), "conv_b": conv_bias,
        "enc_w": enc_w.astype(bf16), "enc_b": enc_b,
        "gru_w": gru_w.astype(bf16), "gru_b": gru_b,
        "dec_w": dec_w.astype(bf16), "dec_b": dec_b,
        "head_w": head_w.astype(bf16), "head_b": head_b,
        "hidden": hidden, "out_dim": out_dim, "hp": hp, "op": op,
    }


def pad_rnn_states(rnn_states, hp):
    """One-time construction of the 128-lane-padded hidden-state carrier (padded lanes = 0).
    The carrier returned by actor_critic_forward is fed straight back the next step."""
    B, hidden = rnn_states.shape
    return jnp.zeros((B, hp), jnp.float32).at[:, :hidden].set(rnn_states)


# ----------------------------------------------------------------------------- forward

def actor_critic_forward(packed, obs, rnn_states_padded):
    """ActorCritic.forward: head -> core (one GRU step) -> tail, as a single fused Pallas
    kernel. Takes/returns the 128-lane-padded hidden-state carrier directly (no per-step
    pad/slice). Returns (out_padded [B, op], new_rnn_states_padded [B, hp]); slice
    out[:, :out_dim] / h[:, :hidden] for logical values."""
    B = obs.shape[0]
    hp, op = packed["hp"], packed["op"]

    obs_flat = obs.reshape(B, -1).astype(jnp.bfloat16)   # NCHW flatten, bf16 for the MXU

    vmem = pl.BlockSpec(memory_space=pltpu.MemorySpace.VMEM)
    inputs = (
        obs_flat, rnn_states_padded,
        packed["conv_w"], packed["conv_b"],
        packed["enc_w"], packed["enc_b"],
        packed["gru_w"], packed["gru_b"],
        packed["dec_w"], packed["dec_b"],
        packed["head_w"], packed["head_b"],
    )
    # TODO(synk): at production batch sizes, add a batch grid (M tiles of 128-256 rows) with
    # dimension_semantics=("parallel",) so v7x's 2 TensorCores both work, keep weight blocks
    # constant-index (resident across the grid), and re-check VMEM against v7x's 32 MiB
    # scoped default. At B=2 a gridless single invocation (< 1.5 MiB total) is correct.
    out_pad, hnew_pad = pl.pallas_call(
        functools.partial(_fused_actor_critic_kernel, hp=hp),
        out_shape=(
            jax.ShapeDtypeStruct((B, op), jnp.float32),
            jax.ShapeDtypeStruct((B, hp), jnp.float32),
        ),
        in_specs=[vmem] * len(inputs),
        out_specs=(vmem, vmem),
    )(*inputs)

    return out_pad, hnew_pad


# ----------------------------------------------------------------------------- pure-JAX reference

def reference_forward(raw, obs, rnn_states, *, stride=2, bf16_matmuls=False):
    """Unfused pure-JAX reference implementing exactly the same math (im2col conv, torch
    NCHW flatten, torch GRUCell, decoder, head). With bf16_matmuls=True it mirrors the
    kernel's bf16-operand / f32-accumulate matmuls so a tight tolerance is meaningful."""
    def mm(a, b):
        if bf16_matmuls:
            a = a.astype(jnp.bfloat16)
            b = b.astype(jnp.bfloat16)
        return jnp.dot(a, b, preferred_element_type=jnp.float32)

    conv_w, conv_b = raw["conv_w"], raw["conv_b"]
    B, C, H, W = obs.shape
    c_out, _, kh, kw = conv_w.shape
    OH = (H - kh) // stride + 1
    OW = (W - kw) // stride + 1
    cols = []
    for i in range(kh):
        for j in range(kw):
            cols.append(obs[:, :, i:i + stride * OH:stride, j:j + stride * OW:stride])
    p = jnp.stack(cols, axis=2)                                         # [B, C, kh*kw, OH, OW]
    p = p.transpose(0, 3, 4, 1, 2).reshape(B * OH * OW, C * kh * kw)    # rows (b,oh,ow), cols (c,i,j)
    conv = jnp.maximum(mm(p, conv_w.reshape(c_out, -1).T) + conv_b, 0.0)
    conv = conv.reshape(B, OH, OW, c_out).transpose(0, 3, 1, 2).reshape(B, -1)  # torch flatten
    x = jnp.maximum(mm(conv, raw["enc_w"]) + raw["enc_b"], 0.0)
    h = rnn_states
    Hd = h.shape[1]
    gi = mm(x, raw["gru_wih"]) + raw["gru_bih"]
    gh = mm(h, raw["gru_whh"]) + raw["gru_bhh"]
    r = jax.nn.sigmoid(gi[:, :Hd] + gh[:, :Hd])
    z = jax.nn.sigmoid(gi[:, Hd:2 * Hd] + gh[:, Hd:2 * Hd])
    n = jnp.tanh(gi[:, 2 * Hd:] + r * gh[:, 2 * Hd:])
    h_new = (1.0 - z) * n + z * h
    dec = jnp.maximum(mm(h_new, raw["dec_w"]) + raw["dec_b"], 0.0)
    out = mm(dec, raw["head_w"]) + raw["head_b"]
    return out, h_new


# ----------------------------------------------------------------------------- main

if __name__ == "__main__":
    key = jax.random.PRNGKey(0)
    k_obs1, k_obs2, k_h, k_params = jax.random.split(key, 4)

    B, C, HW, HIDDEN, OUT = 2, 4, 16, 32, 7
    K, STRIDE = 3, 2

    obs1 = jax.random.normal(k_obs1, (B, C, HW, HW), jnp.float32)
    obs2 = jax.random.normal(k_obs2, (B, C, HW, HW), jnp.float32)
    rnn0 = jax.random.normal(k_h, (B, HIDDEN), jnp.float32)

    raw = init_params(k_params, c_in=C, c_conv=8, k=K, stride=STRIDE,
                      hw=HW, hidden=HIDDEN, out_dim=OUT)
    packed = pack_params(raw, hw=HW, stride=STRIDE, hidden=HIDDEN, out_dim=OUT)
    hp = packed["hp"]

    # Two sequential environment steps: the padded hidden-state carrier from step 1 is fed
    # straight back into step 2 (no per-step pad/slice round trip).
    h0_pad = pad_rnn_states(rnn0, hp)
    out1_pad, h1_pad = actor_critic_forward(packed, obs1, h0_pad)
    out2_pad, h2_pad = actor_critic_forward(packed, obs2, h1_pad)
    jax.block_until_ready((out1_pad, h1_pad, out2_pad, h2_pad))

    out1, h1 = out1_pad[:, :OUT], h1_pad[:, :HIDDEN]
    out2, h2 = out2_pad[:, :OUT], h2_pad[:, :HIDDEN]
    assert out1.shape == (B, OUT) and out2.shape == (B, OUT)
    assert h1.shape == (B, HIDDEN) and h2.shape == (B, HIDDEN)

    # Padded lanes of the carried hidden state must stay exactly zero (GRU-padding invariant).
    assert float(np.abs(np.asarray(h1_pad[:, HIDDEN:])).max()) == 0.0
    assert float(np.abs(np.asarray(h2_pad[:, HIDDEN:])).max()) == 0.0

    # Tight check against a bf16-matched reference (same bf16 operands, f32 accumulation).
    ref1_o, ref1_h = reference_forward(raw, obs1, rnn0, stride=STRIDE, bf16_matmuls=True)
    np.testing.assert_allclose(np.asarray(out1), np.asarray(ref1_o), rtol=5e-3, atol=5e-4)
    np.testing.assert_allclose(np.asarray(h1), np.asarray(ref1_h), rtol=5e-3, atol=5e-4)
    # Step 2 checked per-step (reference fed the kernel's own h1) to validate the padded
    # carrier behaves identically to carrying the logical [B, 32] state.
    ref2_o, ref2_h = reference_forward(raw, obs2, h1, stride=STRIDE, bf16_matmuls=True)
    np.testing.assert_allclose(np.asarray(out2), np.asarray(ref2_o), rtol=5e-3, atol=5e-4)
    np.testing.assert_allclose(np.asarray(h2), np.asarray(ref2_h), rtol=5e-3, atol=5e-4)

    # Loose end-to-end check against the pure-f32 reference (absorbs bf16 weight rounding).
    f32_o, f32_h = reference_forward(raw, obs1, rnn0, stride=STRIDE, bf16_matmuls=False)
    np.testing.assert_allclose(np.asarray(out1), np.asarray(f32_o), rtol=2e-2, atol=2e-2)
    np.testing.assert_allclose(np.asarray(h1), np.asarray(f32_h), rtol=2e-2, atol=2e-2)

    print("KERNEL_OK")
</pallas_src>

<mosaic_0001>
module attributes {stable_mosaic.version = 11 : i64} {
  func.func @_fused_actor_critic_kernel(%arg0: memref<2x1024xbf16, #tpu.memory_space<vmem>>, %arg1: memref<2x128xf32, #tpu.memory_space<vmem>>, %arg2: memref<1024x512xbf16, #tpu.memory_space<vmem>>, %arg3: memref<1x512xf32, #tpu.memory_space<vmem>>, %arg4: memref<512x128xbf16, #tpu.memory_space<vmem>>, %arg5: memref<1x128xf32, #tpu.memory_space<vmem>>, %arg6: memref<256x512xbf16, #tpu.memory_space<vmem>>, %arg7: memref<1x512xf32, #tpu.memory_space<vmem>>, %arg8: memref<128x128xbf16, #tpu.memory_space<vmem>>, %arg9: memref<1x128xf32, #tpu.memory_space<vmem>>, %arg10: memref<128x128xbf16, #tpu.memory_space<vmem>>, %arg11: memref<1x128xf32, #tpu.memory_space<vmem>>, %arg12: memref<2x128xf32, #tpu.memory_space<vmem>>, %arg13: memref<2x128xf32, #tpu.memory_space<vmem>>) attributes {dimension_semantics = [], scalar_prefetch = 0 : i64, scratch_operands = 0 : i64, tpu.core_type = #tpu.core_type<tc>} {
    %c0 = arith.constant 0 : index
    %c0_0 = arith.constant 0 : index
    %0 = vector.load %arg0[%c0, %c0_0] : memref<2x1024xbf16, #tpu.memory_space<vmem>>, vector<2x1024xbf16>
    %c0_1 = arith.constant 0 : index
    %c0_2 = arith.constant 0 : index
    %1 = vector.load %arg2[%c0_1, %c0_2] : memref<1024x512xbf16, #tpu.memory_space<vmem>>, vector<1024x512xbf16>
    %cst = arith.constant dense<0.000000e+00> : vector<2x512xf32>
    %2 = tpu.matmul %0, %1, %cst {dimension_numbers = #tpu.dot_dimension_numbers<[1], [0], [0], [1], [0, 0, 1, 1], [], []>} : vector<2x1024xbf16>, vector<1024x512xbf16>, vector<2x512xf32> -> vector<2x512xf32>
    %c0_3 = arith.constant 0 : index
    %c0_4 = arith.constant 0 : index
    %3 = vector.load %arg3[%c0_3, %c0_4] : memref<1x512xf32, #tpu.memory_space<vmem>>, vector<1x512xf32>
    %4 = vector.broadcast %3 : vector<1x512xf32> to vector<2x512xf32>
    %5 = arith.addf %2, %4 : vector<2x512xf32>
    %cst_5 = arith.constant 0.000000e+00 : f32
    %6 = vector.broadcast %cst_5 : f32 to vector<2x512xf32>
    %7 = arith.maximumf %5, %6 : vector<2x512xf32>
    %8 = arith.truncf %7 : vector<2x512xf32> to vector<2x512xbf16>
    %c0_6 = arith.constant 0 : index
    %c0_7 = arith.constant 0 : index
    %9 = vector.load %arg4[%c0_6, %c0_7] : memref<512x128xbf16, #tpu.memory_space<vmem>>, vector<512x128xbf16>
    %cst_8 = arith.constant dense<0.000000e+00> : vector<2x128xf32>
    %10 = tpu.matmul %8, %9, %cst_8 {dimension_numbers = #tpu.dot_dimension_numbers<[1], [0], [0], [1], [0, 0, 1, 1], [], []>} : vector<2x512xbf16>, vector<512x128xbf16>, vector<2x128xf32> -> vector<2x128xf32>
    %c0_9 = arith.constant 0 : index
    %c0_10 = arith.constant 0 : index
    %11 = vector.load %arg5[%c0_9, %c0_10] : memref<1x128xf32, #tpu.memory_space<vmem>>, vector<1x128xf32>
    %12 = vector.broadcast %11 : vector<1x128xf32> to vector<2x128xf32>
    %13 = arith.addf %10, %12 : vector<2x128xf32>
    %cst_11 = arith.constant 0.000000e+00 : f32
    %14 = vector.broadcast %cst_11 : f32 to vector<2x128xf32>
    %15 = arith.maximumf %13, %14 : vector<2x128xf32>
    %c0_12 = arith.constant 0 : index
    %c0_13 = arith.constant 0 : index
    %16 = vector.load %arg1[%c0_12, %c0_13] : memref<2x128xf32, #tpu.memory_space<vmem>>, vector<2x128xf32>
    %17 = tpu.concatenate %15, %16 in 1 : vector<2x128xf32>, vector<2x128xf32> -> vector<2x256xf32>
    %18 = arith.truncf %17 : vector<2x256xf32> to vector<2x256xbf16>
    %c0_14 = arith.constant 0 : index
    %c0_15 = arith.constant 0 : index
    %19 = vector.load %arg6[%c0_14, %c0_15] : memref<256x512xbf16, #tpu.memory_space<vmem>>, vector<256x512xbf16>
    %cst_16 = arith.constant dense<0.000000e+00> : vector<2x512xf32>
    %20 = tpu.matmul %18, %19, %cst_16 {dimension_numbers = #tpu.dot_dimension_numbers<[1], [0], [0], [1], [0, 0, 1, 1], [], []>} : vector<2x256xbf16>, vector<256x512xbf16>, vector<2x512xf32> -> vector<2x512xf32>
    %c0_17 = arith.constant 0 : index
    %c0_18 = arith.constant 0 : index
    %21 = vector.load %arg7[%c0_17, %c0_18] : memref<1x512xf32, #tpu.memory_space<vmem>>, vector<1x512xf32>
    %22 = vector.broadcast %21 : vector<1x512xf32> to vector<2x512xf32>
    %23 = arith.addf %20, %22 : vector<2x512xf32>
    %24 = vector.extract_strided_slice %23 {offsets = [0, 0], sizes = [2, 128], strides = [1, 1]} : vector<2x512xf32> to vector<2x128xf32>
    %25 = arith.negf %24 : vector<2x128xf32>
    %26 = math.exp %25 : vector<2x128xf32>
    %cst_19 = arith.constant 1.000000e+00 : f32
    %27 = vector.broadcast %cst_19 : f32 to vector<2x128xf32>
    %28 = arith.addf %27, %26 : vector<2x128xf32>
    %29 = arith.divf %27, %28 : vector<2x128xf32>
    %30 = vector.extract_strided_slice %23 {offsets = [0, 128], sizes = [2, 128], strides = [1, 1]} : vector<2x512xf32> to vector<2x128xf32>
    %31 = arith.negf %30 : vector<2x128xf32>
    %32 = math.exp %31 : vector<2x128xf32>
    %cst_20 = arith.constant 1.000000e+00 : f32
    %33 = vector.broadcast %cst_20 : f32 to vector<2x128xf32>
    %34 = arith.addf %33, %32 : vector<2x128xf32>
    %35 = arith.divf %33, %34 : vector<2x128xf32>
    %36 = vector.extract_strided_slice %23 {offsets = [0, 256], sizes = [2, 128], strides = [1, 1]} : vector<2x512xf32> to vector<2x128xf32>
    %37 = vector.extract_strided_slice %23 {offsets = [0, 384], sizes = [2, 128], strides = [1, 1]} : vector<2x512xf32> to vector<2x128xf32>
    %38 = arith.mulf %29, %37 : vector<2x128xf32>
    %39 = arith.addf %36, %38 : vector<2x128xf32>
    %40 = math.tanh %39 : vector<2x128xf32>
    %cst_21 = arith.constant 1.000000e+00 : f32
    %41 = vector.broadcast %cst_21 : f32 to vector<2x128xf32>
    %42 = arith.subf %41, %35 : vector<2x128xf32>
    %43 = arith.mulf %42, %40 : vector<2x128xf32>
    %44 = arith.mulf %35, %16 : vector<2x128xf32>
    %45 = arith.addf %43, %44 : vector<2x128xf32>
    %c0_22 = arith.constant 0 : index
    %c0_23 = arith.constant 0 : index
    %46 = vector.load %arg13[%c0_22, %c0_23] : memref<2x128xf32, #tpu.memory_space<vmem>>, vector<2x128xf32>
    tpu.vector_store %arg13[%c0_22, %c0_23], %45 {strides = array<i32>} : memref<2x128xf32, #tpu.memory_space<vmem>>, vector<2x128xf32>,
    %47 = arith.truncf %45 : vector<2x128xf32> to vector<2x128xbf16>
    %c0_24 = arith.constant 0 : index
    %c0_25 = arith.constant 0 : index
    %48 = vector.load %arg8[%c0_24, %c0_25] : memref<128x128xbf16, #tpu.memory_space<vmem>>, vector<128x128xbf16>
    %cst_26 = arith.constant dense<0.000000e+00> : vector<2x128xf32>
    %49 = tpu.matmul %47, %48, %cst_26 {dimension_numbers = #tpu.dot_dimension_numbers<[1], [0], [0], [1], [0, 0, 1, 1], [], []>} : vector<2x128xbf16>, vector<128x128xbf16>, vector<2x128xf32> -> vector<2x128xf32>
    %c0_27 = arith.constant 0 : index
    %c0_28 = arith.constant 0 : index
    %50 = vector.load %arg9[%c0_27, %c0_28] : memref<1x128xf32, #tpu.memory_space<vmem>>, vector<1x128xf32>
    %51 = vector.broadcast %50 : vector<1x128xf32> to vector<2x128xf32>
    %52 = arith.addf %49, %51 : vector<2x128xf32>
    %cst_29 = arith.constant 0.000000e+00 : f32
    %53 = vector.broadcast %cst_29 : f32 to vector<2x128xf32>
    %54 = arith.maximumf %52, %53 : vector<2x128xf32>
    %55 = arith.truncf %54 : vector<2x128xf32> to vector<2x128xbf16>
    %c0_30 = arith.constant 0 : index
    %c0_31 = arith.constant 0 : index
    %56 = vector.load %arg10[%c0_30, %c0_31] : memref<128x128xbf16, #tpu.memory_space<vmem>>, vector<128x128xbf16>
    %cst_32 = arith.constant dense<0.000000e+00> : vector<2x128xf32>
    %57 = tpu.matmul %55, %56, %cst_32 {dimension_numbers = #tpu.dot_dimension_numbers<[1], [0], [0], [1], [0, 0, 1, 1], [], []>} : vector<2x128xbf16>, vector<128x128xbf16>, vector<2x128xf32> -> vector<2x128xf32>
    %c0_33 = arith.constant 0 : index
    %c0_34 = arith.constant 0 : index
    %58 = vector.load %arg11[%c0_33, %c0_34] : memref<1x128xf32, #tpu.memory_space<vmem>>, vector<1x128xf32>
    %59 = vector.broadcast %58 : vector<1x128xf32> to vector<2x128xf32>
    %60 = arith.addf %57, %59 : vector<2x128xf32>
    %c0_35 = arith.constant 0 : index
    %c0_36 = arith.constant 0 : index
    %61 = vector.load %arg12[%c0_35, %c0_36] : memref<2x128xf32, #tpu.memory_space<vmem>>, vector<2x128xf32>
    tpu.vector_store %arg12[%c0_35, %c0_36], %60 {strides = array<i32>} : memref<2x128xf32, #tpu.memory_space<vmem>>, vector<2x128xf32>,
    return
  }
}

</mosaic_0001>

<llo_original>
// kernel: tpu_custom_call.1
$region0: #{tpu_custom_call.1}
  #allocation0 [shape = 'u32[]', space=smem, size = 0x4, offset = 0x4, fixed_abs, tag = 'smem constant byte address 0x4 - core index']
  #allocation1 [shape = 'u32[144,128]{1,0:T(1,128)}', space=vmem, size = 0x12000, scoped, tag = 'internal scratch']
  %s0 = inlined_call_operand.hbm [shape: bf16[2,1024], index: 0, kind: input, shape index: {}]
  %s1 = inlined_call_operand.hbm [shape: f32[2,128], index: 1, kind: input, shape index: {}]
  %s2 = inlined_call_operand.hbm [shape: bf16[1024,512], index: 2, kind: input, shape index: {}]
  %s3 = inlined_call_operand.vmem [shape: f32[1,512], index: 3, kind: input, shape index: {}]
  %s4 = inlined_call_operand.hbm [shape: bf16[512,128], index: 4, kind: input, shape index: {}]
  %s5 = inlined_call_operand.vmem [shape: f32[1,128], index: 5, kind: input, shape index: {}]
  %s6 = inlined_call_operand.hbm [shape: bf16[256,512], index: 6, kind: input, shape index: {}]
  %s7 = inlined_call_operand.vmem [shape: f32[1,512], index: 7, kind: input, shape index: {}]
  %s8 = inlined_call_operand.hbm [shape: bf16[128,128], index: 8, kind: input, shape index: {}]
  %s9 = inlined_call_operand.vmem [shape: f32[1,128], index: 9, kind: input, shape index: {}]
  %s10 = inlined_call_operand.hbm [shape: bf16[128,128], index: 10, kind: input, shape index: {}]
  %s11 = inlined_call_operand.vmem [shape: f32[1,128], index: 11, kind: input, shape index: {}]
  %s12 = inlined_call_operand.hbm [shape: f32[2,128], index: 12, kind: output, shape index: {0}]
  %s13 = inlined_call_operand.hbm [shape: f32[2,128], index: 13, kind: output, shape index: {1}]
  %14 = xla_tuple %s12, %s13
  %s15 = sld [smem:[#allocation0]]
  $region94: #{tpu_custom_call.1} parent=0
    _
  %s17 = ssub.s32 1, %s15
  %s18 = scalar_select 0, %s17, %s15
  $region1: #{tpu_custom_call.1} parent=0
    #allocation2 [shape = 'u8[4096]{0}', space=vmem, size = 0x1000, scoped, tag = 'input window, operand 0, single buffered']
    #allocation3 [shape = 's32[1]{0}', space=sflag, size = 0x4, scoped, tag = 'scoped memory for tpu_custom_call.1']
    #allocation4 [shape = 's32[1]{0}', space=sflag, size = 0x4, scoped, tag = 'scoped memory for tpu_custom_call.1']
    #allocation5 [shape = 'u8[1024]{0}', space=vmem, size = 0x400, scoped, tag = 'input window, operand 1, single buffered']
    #allocation6 [shape = 's32[1]{0}', space=sflag, size = 0x4, scoped, tag = 'scoped memory for tpu_custom_call.1']
    #allocation7 [shape = 'u8[1048576]{0}', space=vmem, size = 0x100000, scoped, tag = 'input window, operand 2, single buffered']
    #allocation8 [shape = 'u8[131072]{0}', space=vmem, size = 0x20000, scoped, tag = 'input window, operand 4, single buffered']
    #allocation9 [shape = 's32[1]{0}', space=sflag, size = 0x4, scoped, tag = 'scoped memory for tpu_custom_call.1']
    #allocation10 [shape = 'u8[262144]{0}', space=vmem, size = 0x40000, scoped, tag = 'input window, operand 6, single buffered']
    #allocation11 [shape = 'u8[32768]{0}', space=vmem, size = 0x8000, scoped, tag = 'input window, operand 8, single buffered']
    #allocation12 [shape = 's32[1]{0}', space=sflag, size = 0x4, scoped, tag = 'scoped memory for tpu_custom_call.1']
    #allocation13 [shape = 'u8[32768]{0}', space=vmem, size = 0x8000, scoped, tag = 'input window, operand 10, single buffered']
    #allocation14 [shape = 'u8[1024]{0}', space=vmem, size = 0x400, scoped, tag = 'output window, operand 0, single buffered']
    #allocation15 [shape = 'u8[1024]{0}', space=vmem, size = 0x400, scoped, tag = 'output window, operand 1, single buffered']
    #allocation16 [shape = 's32[1]{0}', space=sflag, size = 0x4, scoped, tag = 'scoped memory for tpu_custom_call.1']
    %19 = vsyncpa [#allocation3], 0
    %20 = vsyncpa [#allocation6], 0
    %21 = vsyncpa [#allocation9], 0
    %22 = vsyncpa [#allocation12], 0
    %23 = vsyncpa [#allocation4], 0
    %24 = vsyncpa [#allocation16], 0
    // Predicated region
    $region2: #{tpu_custom_call.1} parent=1 // pred_check
      _
    $region3: #{tpu_custom_call.1} parent=1 // pred_check_branch
      %26 = sbr.rel (0) target = $region5
    $region4: #{tpu_custom_call.1} parent=1 // pred_region
      %s28 = ssub.s32 128, 128
      %29 = vsyncadd [#allocation3], %s28
      %s31 = sshll.u32 [#allocation2], 4
      %s32 = int_to_ptr.vmem [resolvable:$true] %s31
      %34 = dma.hbm_to_vmem [thread:$0]  %s0, 128, %s32, [#allocation3]
    $region5: #{tpu_custom_call.1} parent=1 // pred_fallthru
      _
    // Predicated region
    $region6: #{tpu_custom_call.1} parent=1 // pred_check
      _
    $region7: #{tpu_custom_call.1} parent=1 // pred_check_branch
      %36 = sbr.rel (0) target = $region9
    $region8: #{tpu_custom_call.1} parent=1 // pred_region
      %s38 = ssub.s32 32, 32
      %39 = vsyncadd [#allocation6], %s38
      %s41 = sshll.u32 [#allocation5], 4
      %s42 = int_to_ptr.vmem [resolvable:$true] %s41
      %44 = dma.hbm_to_vmem [thread:$0]  %s1, 32, %s42, [#allocation6]
    $region9: #{tpu_custom_call.1} parent=1 // pred_fallthru
      _
    // Predicated region
    $region10: #{tpu_custom_call.1} parent=1 // pred_check
      _
    $region11: #{tpu_custom_call.1} parent=1 // pred_check_branch
      %46 = sbr.rel (0) target = $region13
    $region12: #{tpu_custom_call.1} parent=1 // pred_region
      %s48 = ssub.s32 32768, 32768
      %49 = vsyncadd [#allocation6], %s48
      %s50 = sshll.u32 [#allocation7], 4
      %s51 = int_to_ptr.vmem [resolvable:$true] %s50
      %56 = dma.hbm_to_vmem [thread:$0]  %s2, 32768, %s51, [#allocation6], 256, 256, 16
    $region13: #{tpu_custom_call.1} parent=1 // pred_fallthru
      _
    // Predicated region
    $region14: #{tpu_custom_call.1} parent=1 // pred_check
      _
    $region15: #{tpu_custom_call.1} parent=1 // pred_check_branch
      %58 = sbr.rel (0) target = $region17
    $region16: #{tpu_custom_call.1} parent=1 // pred_region
      _
    $region17: #{tpu_custom_call.1} parent=1 // pred_fallthru
      _
    // Predicated region
    $region18: #{tpu_custom_call.1} parent=1 // pred_check
      _
    $region19: #{tpu_custom_call.1} parent=1 // pred_check_branch
      %60 = sbr.rel (0) target = $region21
    $region20: #{tpu_custom_call.1} parent=1 // pred_region
      %s62 = ssub.s32 4096, 4096
      %63 = vsyncadd [#allocation9], %s62
      %s64 = sshll.u32 [#allocation8], 4
      %s65 = int_to_ptr.vmem [resolvable:$true] %s64
      %70 = dma.hbm_to_vmem [thread:$0]  %s4, 4096, %s65, [#allocation9], 64, 64, 4
    $region21: #{tpu_custom_call.1} parent=1 // pred_fallthru
      _
    // Predicated region
    $region22: #{tpu_custom_call.1} parent=1 // pred_check
      _
    $region23: #{tpu_custom_call.1} parent=1 // pred_check_branch
      %72 = sbr.rel (0) target = $region25
    $region24: #{tpu_custom_call.1} parent=1 // pred_region
      _
    $region25: #{tpu_custom_call.1} parent=1 // pred_fallthru
      _
    // Predicated region
    $region26: #{tpu_custom_call.1} parent=1 // pred_check
      _
    $region27: #{tpu_custom_call.1} parent=1 // pred_check_branch
      %74 = sbr.rel (0) target = $region29
    $region28: #{tpu_custom_call.1} parent=1 // pred_region
      %s76 = ssub.s32 8192, 8192
      %77 = vsyncadd [#allocation9], %s76
      %s78 = sshll.u32 [#allocation10], 4
      %s79 = int_to_ptr.vmem [resolvable:$true] %s78
      %84 = dma.hbm_to_vmem [thread:$0]  %s6, 8192, %s79, [#allocation9], 256, 256, 16
    $region29: #{tpu_custom_call.1} parent=1 // pred_fallthru
      _
    // Predicated region
    $region30: #{tpu_custom_call.1} parent=1 // pred_check
      _
    $region31: #{tpu_custom_call.1} parent=1 // pred_check_branch
      %86 = sbr.rel (0) target = $region33
    $region32: #{tpu_custom_call.1} parent=1 // pred_region
      _
    $region33: #{tpu_custom_call.1} parent=1 // pred_fallthru
      _
    // Predicated region
    $region34: #{tpu_custom_call.1} parent=1 // pred_check
      _
    $region35: #{tpu_custom_call.1} parent=1 // pred_check_branch
      %88 = sbr.rel (0) target = $region37
    $region36: #{tpu_custom_call.1} parent=1 // pred_region
      %s90 = ssub.s32 1024, 1024
      %91 = vsyncadd [#allocation12], %s90
      %s92 = sshll.u32 [#allocation11], 4
      %s93 = int_to_ptr.vmem [resolvable:$true] %s92
      %98 = dma.hbm_to_vmem [thread:$0]  %s8, 1024, %s93, [#allocation12], 64, 64, 4
    $region37: #{tpu_custom_call.1} parent=1 // pred_fallthru
      _
    // Predicated region
    $region38: #{tpu_custom_call.1} parent=1 // pred_check
      _
    $region39: #{tpu_custom_call.1} parent=1 // pred_check_branch
      %100 = sbr.rel (0) target = $region41
    $region40: #{tpu_custom_call.1} parent=1 // pred_region
      _
    $region41: #{tpu_custom_call.1} parent=1 // pred_fallthru
      _
    // Predicated region
    $region42: #{tpu_custom_call.1} parent=1 // pred_check
      _
    $region43: #{tpu_custom_call.1} parent=1 // pred_check_branch
      %102 = sbr.rel (0) target = $region45
    $region44: #{tpu_custom_call.1} parent=1 // pred_region
      %s104 = ssub.s32 1024, 1024
      %105 = vsyncadd [#allocation12], %s104
      %s106 = sshll.u32 [#allocation13], 4
      %s107 = int_to_ptr.vmem [resolvable:$true] %s106
      %112 = dma.hbm_to_vmem [thread:$0]  %s10, 1024, %s107, [#allocation12], 64, 64, 4
    $region45: #{tpu_custom_call.1} parent=1 // pred_fallthru
      _
    // Predicated region
    $region46: #{tpu_custom_call.1} parent=1 // pred_check
      _
    $region47: #{tpu_custom_call.1} parent=1 // pred_check_branch
      %114 = sbr.rel (0) target = $region49
    $region48: #{tpu_custom_call.1} parent=1 // pred_region
      _
    $region49: #{tpu_custom_call.1} parent=1 // pred_fallthru
      _
    // Predicated region
    $region50: #{tpu_custom_call.1} parent=1 // pred_check
      _
    $region51: #{tpu_custom_call.1} parent=1 // pred_check_branch
      %116 = sbr.rel (0) target = $region53
    $region52: #{tpu_custom_call.1} parent=1 // pred_region
      %117 = dma.done [#allocation3], 128
    $region53: #{tpu_custom_call.1} parent=1 // pred_fallthru
      _
    // Predicated region
    $region54: #{tpu_custom_call.1} parent=1 // pred_check
      _
    $region55: #{tpu_custom_call.1} parent=1 // pred_check_branch
      %119 = sbr.rel (0) target = $region57
    $region56: #{tpu_custom_call.1} parent=1 // pred_region
      %120 = dma.done [#allocation6], 32
    $region57: #{tpu_custom_call.1} parent=1 // pred_fallthru
      _
    // Predicated region
    $region58: #{tpu_custom_call.1} parent=1 // pred_check
      _
    $region59: #{tpu_custom_call.1} parent=1 // pred_check_branch
      %122 = sbr.rel (0) target = $region61
    $region60: #{tpu_custom_call.1} parent=1 // pred_region
      %123 = dma.done [#allocation6], 32768
    $region61: #{tpu_custom_call.1} parent=1 // pred_fallthru
      _
    // Predicated region
    $region62: #{tpu_custom_call.1} parent=1 // pred_check
      _
    $region63: #{tpu_custom_call.1} parent=1 // pred_check_branch
      %125 = sbr.rel (0) target = $region65
    $region64: #{tpu_custom_call.1} parent=1 // pred_region
      %126 = dma.done [#allocation9], 4096
    $region65: #{tpu_custom_call.1} parent=1 // pred_fallthru
      _
    // Predicated region
    $region66: #{tpu_custom_call.1} parent=1 // pred_check
      _
    $region67: #{tpu_custom_call.1} parent=1 // pred_check_branch
      %128 = sbr.rel (0) target = $region69
    $region68: #{tpu_custom_call.1} parent=1 // pred_region
      %129 = dma.done [#allocation9], 8192
    $region69: #{tpu_custom_call.1} parent=1 // pred_fallthru
      _
    // Predicated region
    $region70: #{tpu_custom_call.1} parent=1 // pred_check
      _
    $region71: #{tpu_custom_call.1} parent=1 // pred_check_branch
      %131 = sbr.rel (0) target = $region73
    $region72: #{tpu_custom_call.1} parent=1 // pred_region
      %132 = dma.done [#allocation12], 1024
    $region73: #{tpu_custom_call.1} parent=1 // pred_fallthru
      _
    // Predicated region
    $region74: #{tpu_custom_call.1} parent=1 // pred_check
      _
    $region75: #{tpu_custom_call.1} parent=1 // pred_check_branch
      %134 = sbr.rel (0) target = $region77
    $region76: #{tpu_custom_call.1} parent=1 // pred_region
      %135 = dma.done [#allocation12], 1024
    $region77: #{tpu_custom_call.1} parent=1 // pred_fallthru
      _
    %v137 = vld [vmem:[#allocation2] sm:$0xff]
    %v138 = vld [vmem:[#allocation7] sm:$0xff]
    %v139 = vld [vmem:[#allocation7 + $0x8] sm:$0xff]
    %v140 = vld [vmem:[#allocation7 + $0x10] sm:$0xff]
    %v141 = vld [vmem:[#allocation7 + $0x18] sm:$0xff]
    %v142 = vld [vmem:[#allocation7 + $0x20] sm:$0xff]
    %v143 = vld [vmem:[#allocation7 + $0x28] sm:$0xff]
    %v144 = vld [vmem:[#allocation7 + $0x30] sm:$0xff]
    %v145 = vld [vmem:[#allocation7 + $0x38] sm:$0xff]
    %v146 = vld [vmem:[#allocation7 + $0x40] sm:$0xff]
    %v147 = vld [vmem:[#allocation7 + $0x48] sm:$0xff]
    %v148 = vld [vmem:[#allocation7 + $0x50] sm:$0xff]
    %v149 = vld [vmem:[#allocation7 + $0x58] sm:$0xff]
    %v150 = vld [vmem:[#allocation7 + $0x60] sm:$0xff]
    %v151 = vld [vmem:[#allocation7 + $0x68] sm:$0xff]
    %v152 = vld [vmem:[#allocation7 + $0x70] sm:$0xff]
    %v153 = vld [vmem:[#allocation7 + $0x78] sm:$0xff]
    %v154 = vld [vmem:[#allocation7 + $0x80] sm:$0xff]
    %v155 = vld [vmem:[#allocation7 + $0x88] sm:$0xff]
    %v156 = vld [vmem:[#allocation7 + $0x90] sm:$0xff]
    %v157 = vld [vmem:[#allocation7 + $0x98] sm:$0xff]
    %v158 = vld [vmem:[#allocation7 + $0xa0] sm:$0xff]
    %v159 = vld [vmem:[#allocation7 + $0xa8] sm:$0xff]
    %v160 = vld [vmem:[#allocation7 + $0xb0] sm:$0xff]
    %v161 = vld [vmem:[#allocation7 + $0xb8] sm:$0xff]
    %v162 = vld [vmem:[#allocation7 + $0xc0] sm:$0xff]
    %v163 = vld [vmem:[#allocation7 + $0xc8] sm:$0xff]
    %v164 = vld [vmem:[#allocation7 + $0xd0] sm:$0xff]
    %v165 = vld [vmem:[#allocation7 + $0xd8] sm:$0xff]
    %v166 = vld [vmem:[#allocation7 + $0xe0] sm:$0xff]
    %v167 = vld [vmem:[#allocation7 + $0xe8] sm:$0xff]
    %v168 = vld [vmem:[#allocation7 + $0xf0] sm:$0xff]
    %v169 = vld [vmem:[#allocation7 + $0xf8] sm:$0xff]
    %v170 = vld [vmem:[#allocation7 + $0x100] sm:$0xff]
    %v171 = vld [vmem:[#allocation7 + $0x108] sm:$0xff]
    %v172 = vld [vmem:[#allocation7 + $0x110] sm:$0xff]
    %v173 = vld [vmem:[#allocation7 + $0x118] sm:$0xff]
    %v174 = vld [vmem:[#allocation7 + $0x120] sm:$0xff]
    %v175 = vld [vmem:[#allocation7 + $0x128] sm:$0xff]
    %v176 = vld [vmem:[#allocation7 + $0x130] sm:$0xff]
    %v177 = vld [vmem:[#allocation7 + $0x138] sm:$0xff]
    %v178 = vld [vmem:[#allocation7 + $0x140] sm:$0xff]
    %v179 = vld [vmem:[#allocation7 + $0x148] sm:$0xff]
    %v180 = vld [vmem:[#allocation7 + $0x150] sm:$0xff]
    %v181 = vld [vmem:[#allocation7 + $0x158] sm:$0xff]
    %v182 = vld [vmem:[#allocation7 + $0x160] sm:$0xff]
    %v183 = vld [vmem:[#allocation7 + $0x168] sm:$0xff]
    %v184 = vld [vmem:[#allocation7 + $0x170] sm:$0xff]
    %v185 = vld [vmem:[#allocation7 + $0x178] sm:$0xff]
    %v186 = vld [vmem:[#allocation7 + $0x180] sm:$0xff]
    %v187 = vld [vmem:[#allocation7 + $0x188] sm:$0xff]
    %v188 = vld [vmem:[#allocation7 + $0x190] sm:$0xff]
    %v189 = vld [vmem:[#allocation7 + $0x198] sm:$0xff]
    %v190 = vld [vmem:[#allocation7 + $0x1a0] sm:$0xff]
    %v191 = vld [vmem:[#allocation7 + $0x1a8] sm:$0xff]
    %v192 = vld [vmem:[#allocation7 + $0x1b0] sm:$0xff]
    %v193 = vld [vmem:[#allocation7 + $0x1b8] sm:$0xff]
    %v194 = vld [vmem:[#allocation7 + $0x1c0] sm:$0xff]
    %v195 = vld [vmem:[#allocation7 + $0x1c8] sm:$0xff]
    %v196 = vld [vmem:[#allocation7 + $0x1d0] sm:$0xff]
    %v197 = vld [vmem:[#allocation7 + $0x1d8] sm:$0xff]
    %v198 = vld [vmem:[#allocation7 + $0x1e0] sm:$0xff]
    %v199 = vld [vmem:[#allocation7 + $0x1e8] sm:$0xff]
    %v200 = vld [vmem:[#allocation7 + $0x1f0] sm:$0xff]
    %v201 = vld [vmem:[#allocation7 + $0x1f8] sm:$0xff]
    %v202 = vld [vmem:[#allocation7 + $0x200] sm:$0xff]
    %v203 = vld [vmem:[#allocation7 + $0x208] sm:$0xff]
    %v204 = vld [vmem:[#allocation7 + $0x210] sm:$0xff]
    %v205 = vld [vmem:[#allocation7 + $0x218] sm:$0xff]
    %v206 = vld [vmem:[#allocation7 + $0x220] sm:$0xff]
    %v207 = vld [vmem:[#allocation7 + $0x228] sm:$0xff]
    %v208 = vld [vmem:[#allocation7 + $0x230] sm:$0xff]
    %v209 = vld [vmem:[#allocation7 + $0x238] sm:$0xff]
    %v210 = vld [vmem:[#allocation7 + $0x240] sm:$0xff]
    %v211 = vld [vmem:[#allocation7 + $0x248] sm:$0xff]
    %v212 = vld [vmem:[#allocation7 + $0x250] sm:$0xff]
    %v213 = vld [vmem:[#allocation7 + $0x258] sm:$0xff]
    %v214 = vld [vmem:[#allocation7 + $0x260] sm:$0xff]
    %v215 = vld [vmem:[#allocation7 + $0x268] sm:$0xff]
    %v216 = vld [vmem:[#allocation7 + $0x270] sm:$0xff]
    %v217 = vld [vmem:[#allocation7 + $0x278] sm:$0xff]
    %v218 = vld [vmem:[#allocation7 + $0x280] sm:$0xff]
    %v219 = vld [vmem:[#allocation7 + $0x288] sm:$0xff]
    %v220 = vld [vmem:[#allocation7 + $0x290] sm:$0xff]
    %v221 = vld [vmem:[#allocation7 + $0x298] sm:$0xff]
    %v222 = vld [vmem:[#allocation7 + $0x2a0] sm:$0xff]
    %v223 = vld [vmem:[#allocation7 + $0x2a8] sm:$0xff]
    %v224 = vld [vmem:[#allocation7 + $0x2b0] sm:$0xff]
    %v225 = vld [vmem:[#allocation7 + $0x2b8] sm:$0xff]
    %v226 = vld [vmem:[#allocation7 + $0x2c0] sm:$0xff]
    %v227 = vld [vmem:[#allocation7 + $0x2c8] sm:$0xff]
    %v228 = vld [vmem:[#allocation7 + $0x2d0] sm:$0xff]
    %v229 = vld [vmem:[#allocation7 + $0x2d8] sm:$0xff]
    %v230 = vld [vmem:[#allocation7 + $0x2e0] sm:$0xff]
    %v231 = vld [vmem:[#allocation7 + $0x2e8] sm:$0xff]
    %v232 = vld [vmem:[#allocation7 + $0x2f0] sm:$0xff]
    %v233 = vld [vmem:[#allocation7 + $0x2f8] sm:$0xff]
    %v234 = vld [vmem:[#allocation7 + $0x300] sm:$0xff]
    %v235 = vld [vmem:[#allocation7 + $0x308] sm:$0xff]
    %v236 = vld [vmem:[#allocation7 + $0x310] sm:$0xff]
    %v237 = vld [vmem:[#allocation7 + $0x318] sm:$0xff]
    %v238 = vld [vmem:[#allocation7 + $0x320] sm:$0xff]
    %v239 = vld [vmem:[#allocation7 + $0x328] sm:$0xff]
    %v240 = vld [vmem:[#allocation7 + $0x330] sm:$0xff]
    %v241 = vld [vmem:[#allocation7 + $0x338] sm:$0xff]
    %v242 = vld [vmem:[#allocation7 + $0x340] sm:$0xff]
    %v243 = vld [vmem:[#allocation7 + $0x348] sm:$0xff]
    %v244 = vld [vmem:[#allocation7 + $0x350] sm:$0xff]
    %v245 = vld [vmem:[#allocation7 + $0x358] sm:$0xff]
    %v246 = vld [vmem:[#allocation7 + $0x360] sm:$0xff]
    %v247 = vld [vmem:[#allocation7 + $0x368] sm:$0xff]
    %v248 = vld [vmem:[#allocation7 + $0x370] sm:$0xff]
    %v249 = vld [vmem:[#allocation7 + $0x378] sm:$0xff]
    %v250 = vld [vmem:[#allocation7 + $0x380] sm:$0xff]
    %v251 = vld [vmem:[#allocation7 + $0x388] sm:$0xff]
    %v252 = vld [vmem:[#allocation7 + $0x390] sm:$0xff]
    %v253 = vld [vmem:[#allocation7 + $0x398] sm:$0xff]
    %v254 = vld [vmem:[#allocation7 + $0x3a0] sm:$0xff]
    %v255 = vld [vmem:[#allocation7 + $0x3a8] sm:$0xff]
    %v256 = vld [vmem:[#allocation7 + $0x3b0] sm:$0xff]
    %v257 = vld [vmem:[#allocation7 + $0x3b8] sm:$0xff]
    %v258 = vld [vmem:[#allocation7 + $0x3c0] sm:$0xff]
    %v259 = vld [vmem:[#allocation7 + $0x3c8] sm:$0xff]
    %v260 = vld [vmem:[#allocation7 + $0x3d0] sm:$0xff]
    %v261 = vld [vmem:[#allocation7 + $0x3d8] sm:$0xff]
    %v262 = vld [vmem:[#allocation7 + $0x3e0] sm:$0xff]
    %v263 = vld [vmem:[#allocation7 + $0x3e8] sm:$0xff]
    %v264 = vld [vmem:[#allocation7 + $0x3f0] sm:$0xff]
    %v265 = vld [vmem:[#allocation7 + $0x3f8] sm:$0xff]
    %v266 = vld [vmem:[#allocation7 + $0x400] sm:$0xff]
    %v267 = vld [vmem:[#allocation7 + $0x408] sm:$0xff]
    %v268 = vld [vmem:[#allocation7 + $0x410] sm:$0xff]
    %v269 = vld [vmem:[#allocation7 + $0x418] sm:$0xff]
    %v270 = vld [vmem:[#allocation7 + $0x420] sm:$0xff]
    %v271 = vld [vmem:[#allocation7 + $0x428] sm:$0xff]
    %v272 = vld [vmem:[#allocation7 + $0x430] sm:$0xff]
    %v273 = vld [vmem:[#allocation7 + $0x438] sm:$0xff]
    %v274 = vld [vmem:[#allocation7 + $0x440] sm:$0xff]
    %v275 = vld [vmem:[#allocation7 + $0x448] sm:$0xff]
    %v276 = vld [vmem:[#allocation7 + $0x450] sm:$0xff]
    %v277 = vld [vmem:[#allocation7 + $0x458] sm:$0xff]
    %v278 = vld [vmem:[#allocation7 + $0x460] sm:$0xff]
    %v279 = vld [vmem:[#allocation7 + $0x468] sm:$0xff]
    %v280 = vld [vmem:[#allocation7 + $0x470] sm:$0xff]
    %v281 = vld [vmem:[#allocation7 + $0x478] sm:$0xff]
    %v282 = vld [vmem:[#allocation7 + $0x480] sm:$0xff]
    %v283 = vld [vmem:[#allocation7 + $0x488] sm:$0xff]
    %v284 = vld [vmem:[#allocation7 + $0x490] sm:$0xff]
    %v285 = vld [vmem:[#allocation7 + $0x498] sm:$0xff]
    %v286 = vld [vmem:[#allocation7 + $0x4a0] sm:$0xff]
    %v287 = vld [vmem:[#allocation7 + $0x4a8] sm:$0xff]
    %v288 = vld [vmem:[#allocation7 + $0x4b0] sm:$0xff]
    %v289 = vld [vmem:[#allocation7 + $0x4b8] sm:$0xff]
    %v290 = vld [vmem:[#allocation7 + $0x4c0] sm:$0xff]
    %v291 = vld [vmem:[#allocation7 + $0x4c8] sm:$0xff]
    %v292 = vld [vmem:[#allocation7 + $0x4d0] sm:$0xff]
    %v293 = vld [vmem:[#allocation7 + $0x4d8] sm:$0xff]
    %v294 = vld [vmem:[#allocation7 + $0x4e0] sm:$0xff]
    %v295 = vld [vmem:[#allocation7 + $0x4e8] sm:$0xff]
    %v296 = vld [vmem:[#allocation7 + $0x4f0] sm:$0xff]
    %v297 = vld [vmem:[#allocation7 + $0x4f8] sm:$0xff]
    %v298 = vld [vmem:[#allocation7 + $0x500] sm:$0xff]
    %v299 = vld [vmem:[#allocation7 + $0x508] sm:$0xff]
    %v300 = vld [vmem:[#allocation7 + $0x510] sm:$0xff]
    %v301 = vld [vmem:[#allocation7 + $0x518] sm:$0xff]
    %v302 = vld [vmem:[#allocation7 + $0x520] sm:$0xff]
    %v303 = vld [vmem:[#allocation7 + $0x528] sm:$0xff]
    %v304 = vld [vmem:[#allocation7 + $0x530] sm:$0xff]
    %v305 = vld [vmem:[#allocation7 + $0x538] sm:$0xff]
    %v306 = vld [vmem:[#allocation7 + $0x540] sm:$0xff]
    %v307 = vld [vmem:[#allocation7 + $0x548] sm:$0xff]
    %v308 = vld [vmem:[#allocation7 + $0x550] sm:$0xff]
    %v309 = vld [vmem:[#allocation7 + $0x558] sm:$0xff]
    %v310 = vld [vmem:[#allocation7 + $0x560] sm:$0xff]
    %v311 = vld [vmem:[#allocation7 + $0x568] sm:$0xff]
    %v312 = vld [vmem:[#allocation7 + $0x570] sm:$0xff]
    %v313 = vld [vmem:[#allocation7 + $0x578] sm:$0xff]
    %v314 = vld [vmem:[#allocation7 + $0x580] sm:$0xff]
    %v315 = vld [vmem:[#allocation7 + $0x588] sm:$0xff]
    %v316 = vld [vmem:[#allocation7 + $0x590] sm:$0xff]
    %v317 = vld [vmem:[#allocation7 + $0x598] sm:$0xff]
    %v318 = vld [vmem:[#allocation7 + $0x5a0] sm:$0xff]
    %v319 = vld [vmem:[#allocation7 + $0x5a8] sm:$0xff]
    %v320 = vld [vmem:[#allocation7 + $0x5b0] sm:$0xff]
    %v321 = vld [vmem:[#allocation7 + $0x5b8] sm:$0xff]
    %v322 = vld [vmem:[#allocation7 + $0x5c0] sm:$0xff]
    %v323 = vld [vmem:[#allocation7 + $0x5c8] sm:$0xff]
    %v324 = vld [vmem:[#allocation7 + $0x5d0] sm:$0xff]
    %v325 = vld [vmem:[#allocation7 + $0x5d8] sm:$0xff]
    %v326 = vld [vmem:[#allocation7 + $0x5e0] sm:$0xff]
    %v327 = vld [vmem:[#allocation7 + $0x5e8] sm:$0xff]
    %v328 = vld [vmem:[#allocation7 + $0x5f0] sm:$0xff]
    %v329 = vld [vmem:[#allocation7 + $0x5f8] sm:$0xff]
    %v330 = vld [vmem:[#allocation7 + $0x600] sm:$0xff]
    %v331 = vld [vmem:[#allocation7 + $0x608] sm:$0xff]
    %v332 = vld [vmem:[#allocation7 + $0x610] sm:$0xff]
    %v333 = vld [vmem:[#allocation7 + $0x618] sm:$0xff]
    %v334 = vld [vmem:[#allocation7 + $0x620] sm:$0xff]
    %v335 = vld [vmem:[#allocation7 + $0x628] sm:$0xff]
    %v336 = vld [vmem:[#allocation7 + $0x630] sm:$0xff]
    %v337 = vld [vmem:[#allocation7 + $0x638] sm:$0xff]
    %v338 = vld [vmem:[#allocation7 + $0x640] sm:$0xff]
    %v339 = vld [vmem:[#allocation7 + $0x648] sm:$0xff]
    %v340 = vld [vmem:[#allocation7 + $0x650] sm:$0xff]
    %v341 = vld [vmem:[#allocation7 + $0x658] sm:$0xff]
    %v342 = vld [vmem:[#allocation7 + $0x660] sm:$0xff]
    %v343 = vld [vmem:[#allocation7 + $0x668] sm:$0xff]
    %v344 = vld [vmem:[#allocation7 + $0x670] sm:$0xff]
    %v345 = vld [vmem:[#allocation7 + $0x678] sm:$0xff]
    %v346 = vld [vmem:[#allocation7 + $0x680] sm:$0xff]
    %v347 = vld [vmem:[#allocation7 + $0x688] sm:$0xff]
    %v348 = vld [vmem:[#allocation7 + $0x690] sm:$0xff]
    %v349 = vld [vmem:[#allocation7 + $0x698] sm:$0xff]
    %v350 = vld [vmem:[#allocation7 + $0x6a0] sm:$0xff]
    %v351 = vld [vmem:[#allocation7 + $0x6a8] sm:$0xff]
    %v352 = vld [vmem:[#allocation7 + $0x6b0] sm:$0xff]
    %v353 = vld [vmem:[#allocation7 + $0x6b8] sm:$0xff]
    %v354 = vld [vmem:[#allocation7 + $0x6c0] sm:$0xff]
    %v355 = vld [vmem:[#allocation7 + $0x6c8] sm:$0xff]
    %v356 = vld [vmem:[#allocation7 + $0x6d0] sm:$0xff]
    %v357 = vld [vmem:[#allocation7 + $0x6d8] sm:$0xff]
    %v358 = vld [vmem:[#allocation7 + $0x6e0] sm:$0xff]
    %v359 = vld [vmem:[#allocation7 + $0x6e8] sm:$0xff]
    %v360 = vld [vmem:[#allocation7 + $0x6f0] sm:$0xff]
    %v361 = vld [vmem:[#allocation7 + $0x6f8] sm:$0xff]
    %v362 = vld [vmem:[#allocation7 + $0x700] sm:$0xff]
    %v363 = vld [vmem:[#allocation7 + $0x708] sm:$0xff]
    %v364 = vld [vmem:[#allocation7 + $0x710] sm:$0xff]
    %v365 = vld [vmem:[#allocation7 + $0x718] sm:$0xff]
    %v366 = vld [vmem:[#allocation7 + $0x720] sm:$0xff]
    %v367 = vld [vmem:[#allocation7 + $0x728] sm:$0xff]
    %v368 = vld [vmem:[#allocation7 + $0x730] sm:$0xff]
    %v369 = vld [vmem:[#allocation7 + $0x738] sm:$0xff]
    %v370 = vld [vmem:[#allocation7 + $0x740] sm:$0xff]
    %v371 = vld [vmem:[#allocation7 + $0x748] sm:$0xff]
    %v372 = vld [vmem:[#allocation7 + $0x750] sm:$0xff]
    %v373 = vld [vmem:[#allocation7 + $0x758] sm:$0xff]
    %v374 = vld [vmem:[#allocation7 + $0x760] sm:$0xff]
    %v375 = vld [vmem:[#allocation7 + $0x768] sm:$0xff]
    %v376 = vld [vmem:[#allocation7 + $0x770] sm:$0xff]
    %v377 = vld [vmem:[#allocation7 + $0x778] sm:$0xff]
    %v378 = vld [vmem:[#allocation7 + $0x780] sm:$0xff]
    %v379 = vld [vmem:[#allocation7 + $0x788] sm:$0xff]
    %v380 = vld [vmem:[#allocation7 + $0x790] sm:$0xff]
    %v381 = vld [vmem:[#allocation7 + $0x798] sm:$0xff]
    %v382 = vld [vmem:[#allocation7 + $0x7a0] sm:$0xff]
    %v383 = vld [vmem:[#allocation7 + $0x7a8] sm:$0xff]
    %v384 = vld [vmem:[#allocation7 + $0x7b0] sm:$0xff]
    %v385 = vld [vmem:[#allocation7 + $0x7b8] sm:$0xff]
    %v386 = vld [vmem:[#allocation7 + $0x7c0] sm:$0xff]
    %v387 = vld [vmem:[#allocation7 + $0x7c8] sm:$0xff]
    %v388 = vld [vmem:[#allocation7 + $0x7d0] sm:$0xff]
    %v389 = vld [vmem:[#allocation7 + $0x7d8] sm:$0xff]
    %v390 = vld [vmem:[#allocation7 + $0x7e0] sm:$0xff]
    %v391 = vld [vmem:[#allocation7 + $0x7e8] sm:$0xff]
    %v392 = vld [vmem:[#allocation7 + $0x7f0] sm:$0xff]
    %v393 = vld [vmem:[#allocation7 + $0x7f8] sm:$0xff]
    %v394 = vld [vmem:[%s3] sm:$0xf]
    %v396 = vlaneseq
    %v397 = vshrl.u32 %v396, 7
    %v398 = vsub.s32 0, %v397
    %v399 = vrot.slane %v394, %v398
    %v400 = vlaneseq
    %v401 = vshrl.u32 %v400, 7
    %v402 = vsub.s32 1, %v401
    %v403 = vrot.slane %v394, %v402
    %v404 = vlaneseq
    %v405 = vshrl.u32 %v404, 7
    %v406 = vsub.s32 2, %v405
    %v407 = vrot.slane %v394, %v406
    %v408 = vlaneseq
    %v409 = vshrl.u32 %v408, 7
    %v410 = vsub.s32 3, %v409
    %v411 = vrot.slane %v394, %v410
    %v417 = vcombine.high %v137, %v137
    %v419 = vunpack.c.l.s4 1966171168
    %v420 = vunpack.c.0.s8 %v419
    %v421 = vlaneseq
    %v422 = vshrl.u32 %v421, 7
    %v423 = vsub.s32 %v420, %v422
    %v424 = vrot.slane %v137, %v423
    %v426 = vunpack.c.l.s4 1966171168
    %v427 = vunpack.c.0.s8 %v426
    %v428 = vlaneseq
    %v429 = vshrl.u32 %v428, 7
    %v430 = vsub.s32 %v427, %v429
    %v431 = vrot.slane %v417, %v430
    %v432 = vcombine.high %v424, %v424
    %v433 = vcombine.high %v431, %v431
    %v435 = vunpack.c.l.s4 1966171168
    %v436 = vunpack.c.0.s8 %v435
    %v437 = vlaneseq
    %v438 = vshrl.u32 %v437, 7
    %v439 = vsub.s32 %v436, %v438
    %v440 = vrot.slane %v424, %v439
    %v442 = vunpack.c.l.s4 1966171168
    %v443 = vunpack.c.0.s8 %v442
    %v444 = vlaneseq
    %v445 = vshrl.u32 %v444, 7
    %v446 = vsub.s32 %v443, %v445
    %v447 = vrot.slane %v431, %v446
    %v449 = vunpack.c.l.s4 1966171168
    %v450 = vunpack.c.0.s8 %v449
    %v451 = vlaneseq
    %v452 = vshrl.u32 %v451, 7
    %v453 = vsub.s32 %v450, %v452
    %v454 = vrot.slane %v432, %v453
    %v456 = vunpack.c.l.s4 1966171168
    %v457 = vunpack.c.0.s8 %v456
    %v458 = vlaneseq
    %v459 = vshrl.u32 %v458, 7
    %v460 = vsub.s32 %v457, %v459
    %v461 = vrot.slane %v433, %v460
    %v462 = vcombine.high %v440, %v440
    %v463 = vcombine.high %v447, %v447
    %v464 = vcombine.high %v454, %v454
    %v465 = vcombine.high %v461, %v461
    %v730 = vunpack.c.l.b16 %v138
    %v731 = vunpack.c.h.b16 %v138
    %v732 = vunpack.c.l.b16 %v139
    %v733 = vunpack.c.h.b16 %v139
    %v734 = vunpack.c.l.b16 %v140
    %v735 = vunpack.c.h.b16 %v140
    %v736 = vunpack.c.l.b16 %v141
    %v737 = vunpack.c.h.b16 %v141
    %v738 = vunpack.c.l.b16 %v142
    %v739 = vunpack.c.h.b16 %v142
    %v740 = vunpack.c.l.b16 %v143
    %v741 = vunpack.c.h.b16 %v143
    %v742 = vunpack.c.l.b16 %v144
    %v743 = vunpack.c.h.b16 %v144
    %v744 = vunpack.c.l.b16 %v145
    %v745 = vunpack.c.h.b16 %v145
    %v746 = vunpack.c.l.b16 %v146
    %v747 = vunpack.c.h.b16 %v146
    %v748 = vunpack.c.l.b16 %v147
    %v749 = vunpack.c.h.b16 %v147
    %v750 = vunpack.c.l.b16 %v148
    %v751 = vunpack.c.h.b16 %v148
    %v752 = vunpack.c.l.b16 %v149
    %v753 = vunpack.c.h.b16 %v149
    %v754 = vunpack.c.l.b16 %v150
    %v755 = vunpack.c.h.b16 %v150
    %v756 = vunpack.c.l.b16 %v151
    %v757 = vunpack.c.h.b16 %v151
    %v758 = vunpack.c.l.b16 %v152
    %v759 = vunpack.c.h.b16 %v152
    %v760 = vunpack.c.l.b16 %v153
    %v761 = vunpack.c.h.b16 %v153
    %v762 = vunpack.c.l.b16 %v154
    %v763 = vunpack.c.h.b16 %v154
    %v764 = vunpack.c.l.b16 %v155
    %v765 = vunpack.c.h.b16 %v155
    %v766 = vunpack.c.l.b16 %v156
    %v767 = vunpack.c.h.b16 %v156
    %v768 = vunpack.c.l.b16 %v157
    %v769 = vunpack.c.h.b16 %v157
    %v770 = vunpack.c.l.b16 %v158
    %v771 = vunpack.c.h.b16 %v158
    %v772 = vunpack.c.l.b16 %v159
    %v773 = vunpack.c.h.b16 %v159
    %v774 = vunpack.c.l.b16 %v160
    %v775 = vunpack.c.h.b16 %v160
    %v776 = vunpack.c.l.b16 %v161
    %v777 = vunpack.c.h.b16 %v161
    %v778 = vunpack.c.l.b16 %v162
    %v779 = vunpack.c.h.b16 %v162
    %v780 = vunpack.c.l.b16 %v163
    %v781 = vunpack.c.h.b16 %v163
    %v782 = vunpack.c.l.b16 %v164
    %v783 = vunpack.c.h.b16 %v164
    %v784 = vunpack.c.l.b16 %v165
    %v785 = vunpack.c.h.b16 %v165
    %v786 = vunpack.c.l.b16 %v166
    %v787 = vunpack.c.h.b16 %v166
    %v788 = vunpack.c.l.b16 %v167
    %v789 = vunpack.c.h.b16 %v167
    %v790 = vunpack.c.l.b16 %v168
    %v791 = vunpack.c.h.b16 %v168
    %v792 = vunpack.c.l.b16 %v169
    %v793 = vunpack.c.h.b16 %v169
    %v794 = vunpack.c.l.b16 %v170
    %v795 = vunpack.c.h.b16 %v170
    %v796 = vunpack.c.l.b16 %v171
    %v797 = vunpack.c.h.b16 %v171
    %v798 = vunpack.c.l.b16 %v172
    %v799 = vunpack.c.h.b16 %v172
    %v800 = vunpack.c.l.b16 %v173
    %v801 = vunpack.c.h.b16 %v173
    %v802 = vunpack.c.l.b16 %v174
    %v803 = vunpack.c.h.b16 %v174
    %v804 = vunpack.c.l.b16 %v175
    %v805 = vunpack.c.h.b16 %v175
    %v806 = vunpack.c.l.b16 %v176
    %v807 = vunpack.c.h.b16 %v176
    %v808 = vunpack.c.l.b16 %v177
    %v809 = vunpack.c.h.b16 %v177
    %v810 = vunpack.c.l.b16 %v178
    %v811 = vunpack.c.h.b16 %v178
    %v812 = vunpack.c.l.b16 %v179
    %v813 = vunpack.c.h.b16 %v179
    %v814 = vunpack.c.l.b16 %v180
    %v815 = vunpack.c.h.b16 %v180
    %v816 = vunpack.c.l.b16 %v181
    %v817 = vunpack.c.h.b16 %v181
    %v818 = vunpack.c.l.b16 %v182
    %v819 = vunpack.c.h.b16 %v182
    %v820 = vunpack.c.l.b16 %v183
    %v821 = vunpack.c.h.b16 %v183
    %v822 = vunpack.c.l.b16 %v184
    %v823 = vunpack.c.h.b16 %v184
    %v824 = vunpack.c.l.b16 %v185
    %v825 = vunpack.c.h.b16 %v185
    %v826 = vunpack.c.l.b16 %v186
    %v827 = vunpack.c.h.b16 %v186
    %v828 = vunpack.c.l.b16 %v187
    %v829 = vunpack.c.h.b16 %v187
    %v830 = vunpack.c.l.b16 %v188
    %v831 = vunpack.c.h.b16 %v188
    %v832 = vunpack.c.l.b16 %v189
    %v833 = vunpack.c.h.b16 %v189
    %v834 = vunpack.c.l.b16 %v190
    %v835 = vunpack.c.h.b16 %v190
    %v836 = vunpack.c.l.b16 %v191
    %v837 = vunpack.c.h.b16 %v191
    %v838 = vunpack.c.l.b16 %v192
    %v839 = vunpack.c.h.b16 %v192
    %v840 = vunpack.c.l.b16 %v193
    %v841 = vunpack.c.h.b16 %v193
    %v842 = vunpack.c.l.b16 %v194
    %v843 = vunpack.c.h.b16 %v194
    %v844 = vunpack.c.l.b16 %v195
    %v845 = vunpack.c.h.b16 %v195
    %v846 = vunpack.c.l.b16 %v196
    %v847 = vunpack.c.h.b16 %v196
    %v848 = vunpack.c.l.b16 %v197
    %v849 = vunpack.c.h.b16 %v197
    %v850 = vunpack.c.l.b16 %v198
    %v851 = vunpack.c.h.b16 %v198
    %v852 = vunpack.c.l.b16 %v199
    %v853 = vunpack.c.h.b16 %v199
    %v854 = vunpack.c.l.b16 %v200
    %v855 = vunpack.c.h.b16 %v200
    %v856 = vunpack.c.l.b16 %v201
    %v857 = vunpack.c.h.b16 %v201
    %v858 = vunpack.c.l.b16 %v202
    %v859 = vunpack.c.h.b16 %v202
    %v860 = vunpack.c.l.b16 %v203
    %v861 = vunpack.c.h.b16 %v203
    %v862 = vunpack.c.l.b16 %v204
    %v863 = vunpack.c.h.b16 %v204
    %v864 = vunpack.c.l.b16 %v205
    %v865 = vunpack.c.h.b16 %v205
    %v866 = vunpack.c.l.b16 %v206
    %v867 = vunpack.c.h.b16 %v206
    %v868 = vunpack.c.l.b16 %v207
    %v869 = vunpack.c.h.b16 %v207
    %v870 = vunpack.c.l.b16 %v208
    %v871 = vunpack.c.h.b16 %v208
    %v872 = vunpack.c.l.b16 %v209
    %v873 = vunpack.c.h.b16 %v209
    %v874 = vunpack.c.l.b16 %v210
    %v875 = vunpack.c.h.b16 %v210
    %v876 = vunpack.c.l.b16 %v211
    %v877 = vunpack.c.h.b16 %v211
    %v878 = vunpack.c.l.b16 %v212
    %v879 = vunpack.c.h.b16 %v212
    %v880 = vunpack.c.l.b16 %v213
    %v881 = vunpack.c.h.b16 %v213
    %v882 = vunpack.c.l.b16 %v214
    %v883 = vunpack.c.h.b16 %v214
    %v884 = vunpack.c.l.b16 %v215
    %v885 = vunpack.c.h.b16 %v215
    %v886 = vunpack.c.l.b16 %v216
    %v887 = vunpack.c.h.b16 %v216
    %v888 = vunpack.c.l.b16 %v217
    %v889 = vunpack.c.h.b16 %v217
    %v890 = vunpack.c.l.b16 %v218
    %v891 = vunpack.c.h.b16 %v218
    %v892 = vunpack.c.l.b16 %v219
    %v893 = vunpack.c.h.b16 %v219
    %v894 = vunpack.c.l.b16 %v220
    %v895 = vunpack.c.h.b16 %v220
    %v896 = vunpack.c.l.b16 %v221
    %v897 = vunpack.c.h.b16 %v221
    %v898 = vunpack.c.l.b16 %v222
    %v899 = vunpack.c.h.b16 %v222
    %v900 = vunpack.c.l.b16 %v223
    %v901 = vunpack.c.h.b16 %v223
    %v902 = vunpack.c.l.b16 %v224
    %v903 = vunpack.c.h.b16 %v224
    %v904 = vunpack.c.l.b16 %v225
    %v905 = vunpack.c.h.b16 %v225
    %v906 = vunpack.c.l.b16 %v226
    %v907 = vunpack.c.h.b16 %v226
    %v908 = vunpack.c.l.b16 %v227
    %v909 = vunpack.c.h.b16 %v227
    %v910 = vunpack.c.l.b16 %v228
    %v911 = vunpack.c.h.b16 %v228
    %v912 = vunpack.c.l.b16 %v229
    %v913 = vunpack.c.h.b16 %v229
    %v914 = vunpack.c.l.b16 %v230
    %v915 = vunpack.c.h.b16 %v230
    %v916 = vunpack.c.l.b16 %v231
    %v917 = vunpack.c.h.b16 %v231
    %v918 = vunpack.c.l.b16 %v232
    %v919 = vunpack.c.h.b16 %v232
    %v920 = vunpack.c.l.b16 %v233
    %v921 = vunpack.c.h.b16 %v233
    %v922 = vunpack.c.l.b16 %v234
    %v923 = vunpack.c.h.b16 %v234
    %v924 = vunpack.c.l.b16 %v235
    %v925 = vunpack.c.h.b16 %v235
    %v926 = vunpack.c.l.b16 %v236
    %v927 = vunpack.c.h.b16 %v236
    %v928 = vunpack.c.l.b16 %v237
    %v929 = vunpack.c.h.b16 %v237
    %v930 = vunpack.c.l.b16 %v238
    %v931 = vunpack.c.h.b16 %v238
    %v932 = vunpack.c.l.b16 %v239
    %v933 = vunpack.c.h.b16 %v239
    %v934 = vunpack.c.l.b16 %v240
    %v935 = vunpack.c.h.b16 %v240
    %v936 = vunpack.c.l.b16 %v241
    %v937 = vunpack.c.h.b16 %v241
    %v938 = vunpack.c.l.b16 %v242
    %v939 = vunpack.c.h.b16 %v242
    %v940 = vunpack.c.l.b16 %v243
    %v941 = vunpack.c.h.b16 %v243
    %v942 = vunpack.c.l.b16 %v244
    %v943 = vunpack.c.h.b16 %v244
    %v944 = vunpack.c.l.b16 %v245
    %v945 = vunpack.c.h.b16 %v245
    %v946 = vunpack.c.l.b16 %v246
    %v947 = vunpack.c.h.b16 %v246
    %v948 = vunpack.c.l.b16 %v247
    %v949 = vunpack.c.h.b16 %v247
    %v950 = vunpack.c.l.b16 %v248
    %v951 = vunpack.c.h.b16 %v248
    %v952 = vunpack.c.l.b16 %v249
    %v953 = vunpack.c.h.b16 %v249
    %v954 = vunpack.c.l.b16 %v250
    %v955 = vunpack.c.h.b16 %v250
    %v956 = vunpack.c.l.b16 %v251
    %v957 = vunpack.c.h.b16 %v251
    %v958 = vunpack.c.l.b16 %v252
    %v959 = vunpack.c.h.b16 %v252
    %v960 = vunpack.c.l.b16 %v253
    %v961 = vunpack.c.h.b16 %v253
    %v962 = vunpack.c.l.b16 %v254
    %v963 = vunpack.c.h.b16 %v254
    %v964 = vunpack.c.l.b16 %v255
    %v965 = vunpack.c.h.b16 %v255
    %v966 = vunpack.c.l.b16 %v256
    %v967 = vunpack.c.h.b16 %v256
    %v968 = vunpack.c.l.b16 %v257
    %v969 = vunpack.c.h.b16 %v257
    %v970 = vunpack.c.l.b16 %v258
    %v971 = vunpack.c.h.b16 %v258
    %v972 = vunpack.c.l.b16 %v259
    %v973 = vunpack.c.h.b16 %v259
    %v974 = vunpack.c.l.b16 %v260
    %v975 = vunpack.c.h.b16 %v260
    %v976 = vunpack.c.l.b16 %v261
    %v977 = vunpack.c.h.b16 %v261
    %v978 = vunpack.c.l.b16 %v262
    %v979 = vunpack.c.h.b16 %v262
    %v980 = vunpack.c.l.b16 %v263
    %v981 = vunpack.c.h.b16 %v263
    %v982 = vunpack.c.l.b16 %v264
    %v983 = vunpack.c.h.b16 %v264
    %v984 = vunpack.c.l.b16 %v265
    %v985 = vunpack.c.h.b16 %v265
    %v986 = vunpack.c.l.b16 %v266
    %v987 = vunpack.c.h.b16 %v266
    %v988 = vunpack.c.l.b16 %v267
    %v989 = vunpack.c.h.b16 %v267
    %v990 = vunpack.c.l.b16 %v268
    %v991 = vunpack.c.h.b16 %v268
    %v992 = vunpack.c.l.b16 %v269
    %v993 = vunpack.c.h.b16 %v269
    %v994 = vunpack.c.l.b16 %v270
    %v995 = vunpack.c.h.b16 %v270
    %v996 = vunpack.c.l.b16 %v271
    %v997 = vunpack.c.h.b16 %v271
    %v998 = vunpack.c.l.b16 %v272
    %v999 = vunpack.c.h.b16 %v272
    %v1000 = vunpack.c.l.b16 %v273
    %v1001 = vunpack.c.h.b16 %v273
    %v1002 = vunpack.c.l.b16 %v274
    %v1003 = vunpack.c.h.b16 %v274
    %v1004 = vunpack.c.l.b16 %v275
    %v1005 = vunpack.c.h.b16 %v275
    %v1006 = vunpack.c.l.b16 %v276
    %v1007 = vunpack.c.h.b16 %v276
    %v1008 = vunpack.c.l.b16 %v277
    %v1009 = vunpack.c.h.b16 %v277
    %v1010 = vunpack.c.l.b16 %v278
    %v1011 = vunpack.c.h.b16 %v278
    %v1012 = vunpack.c.l.b16 %v279
    %v1013 = vunpack.c.h.b16 %v279
    %v1014 = vunpack.c.l.b16 %v280
    %v1015 = vunpack.c.h.b16 %v280
    %v1016 = vunpack.c.l.b16 %v281
    %v1017 = vunpack.c.h.b16 %v281
    %v1018 = vunpack.c.l.b16 %v282
    %v1019 = vunpack.c.h.b16 %v282
    %v1020 = vunpack.c.l.b16 %v283
    %v1021 = vunpack.c.h.b16 %v283
    %v1022 = vunpack.c.l.b16 %v284
    %v1023 = vunpack.c.h.b16 %v284
    %v1024 = vunpack.c.l.b16 %v285
    %v1025 = vunpack.c.h.b16 %v285
    %v1026 = vunpack.c.l.b16 %v286
    %v1027 = vunpack.c.h.b16 %v286
    %v1028 = vunpack.c.l.b16 %v287
    %v1029 = vunpack.c.h.b16 %v287
    %v1030 = vunpack.c.l.b16 %v288
    %v1031 = vunpack.c.h.b16 %v288
    %v1032 = vunpack.c.l.b16 %v289
    %v1033 = vunpack.c.h.b16 %v289
    %v1034 = vunpack.c.l.b16 %v290
    %v1035 = vunpack.c.h.b16 %v290
    %v1036 = vunpack.c.l.b16 %v291
    %v1037 = vunpack.c.h.b16 %v291
    %v1038 = vunpack.c.l.b16 %v292
    %v1039 = vunpack.c.h.b16 %v292
    %v1040 = vunpack.c.l.b16 %v293
    %v1041 = vunpack.c.h.b16 %v293
    %v1042 = vunpack.c.l.b16 %v294
    %v1043 = vunpack.c.h.b16 %v294
    %v1044 = vunpack.c.l.b16 %v295
    %v1045 = vunpack.c.h.b16 %v295
    %v1046 = vunpack.c.l.b16 %v296
    %v1047 = vunpack.c.h.b16 %v296
    %v1048 = vunpack.c.l.b16 %v297
    %v1049 = vunpack.c.h.b16 %v297
    %v1050 = vunpack.c.l.b16 %v298
    %v1051 = vunpack.c.h.b16 %v298
    %v1052 = vunpack.c.l.b16 %v299
    %v1053 = vunpack.c.h.b16 %v299
    %v1054 = vunpack.c.l.b16 %v300
    %v1055 = vunpack.c.h.b16 %v300
    %v1056 = vunpack.c.l.b16 %v301
    %v1057 = vunpack.c.h.b16 %v301
    %v1058 = vunpack.c.l.b16 %v302
    %v1059 = vunpack.c.h.b16 %v302
    %v1060 = vunpack.c.l.b16 %v303
    %v1061 = vunpack.c.h.b16 %v303
    %v1062 = vunpack.c.l.b16 %v304
    %v1063 = vunpack.c.h.b16 %v304
    %v1064 = vunpack.c.l.b16 %v305
    %v1065 = vunpack.c.h.b16 %v305
    %v1066 = vunpack.c.l.b16 %v306
    %v1067 = vunpack.c.h.b16 %v306
    %v1068 = vunpack.c.l.b16 %v307
    %v1069 = vunpack.c.h.b16 %v307
    %v1070 = vunpack.c.l.b16 %v308
    %v1071 = vunpack.c.h.b16 %v308
    %v1072 = vunpack.c.l.b16 %v309
    %v1073 = vunpack.c.h.b16 %v309
    %v1074 = vunpack.c.l.b16 %v310
    %v1075 = vunpack.c.h.b16 %v310
    %v1076 = vunpack.c.l.b16 %v311
    %v1077 = vunpack.c.h.b16 %v311
    %v1078 = vunpack.c.l.b16 %v312
    %v1079 = vunpack.c.h.b16 %v312
    %v1080 = vunpack.c.l.b16 %v313
    %v1081 = vunpack.c.h.b16 %v313
    %v1082 = vunpack.c.l.b16 %v314
    %v1083 = vunpack.c.h.b16 %v314
    %v1084 = vunpack.c.l.b16 %v315
    %v1085 = vunpack.c.h.b16 %v315
    %v1086 = vunpack.c.l.b16 %v316
    %v1087 = vunpack.c.h.b16 %v316
    %v1088 = vunpack.c.l.b16 %v317
    %v1089 = vunpack.c.h.b16 %v317
    %v1090 = vunpack.c.l.b16 %v318
    %v1091 = vunpack.c.h.b16 %v318
    %v1092 = vunpack.c.l.b16 %v319
    %v1093 = vunpack.c.h.b16 %v319
    %v1094 = vunpack.c.l.b16 %v320
    %v1095 = vunpack.c.h.b16 %v320
    %v1096 = vunpack.c.l.b16 %v321
    %v1097 = vunpack.c.h.b16 %v321
    %v1098 = vunpack.c.l.b16 %v322
    %v1099 = vunpack.c.h.b16 %v322
    %v1100 = vunpack.c.l.b16 %v323
    %v1101 = vunpack.c.h.b16 %v323
    %v1102 = vunpack.c.l.b16 %v324
    %v1103 = vunpack.c.h.b16 %v324
    %v1104 = vunpack.c.l.b16 %v325
    %v1105 = vunpack.c.h.b16 %v325
    %v1106 = vunpack.c.l.b16 %v326
    %v1107 = vunpack.c.h.b16 %v326
    %v1108 = vunpack.c.l.b16 %v327
    %v1109 = vunpack.c.h.b16 %v327
    %v1110 = vunpack.c.l.b16 %v328
    %v1111 = vunpack.c.h.b16 %v328
    %v1112 = vunpack.c.l.b16 %v329
    %v1113 = vunpack.c.h.b16 %v329
    %v1114 = vunpack.c.l.b16 %v330
    %v1115 = vunpack.c.h.b16 %v330
    %v1116 = vunpack.c.l.b16 %v331
    %v1117 = vunpack.c.h.b16 %v331
    %v1118 = vunpack.c.l.b16 %v332
    %v1119 = vunpack.c.h.b16 %v332
    %v1120 = vunpack.c.l.b16 %v333
    %v1121 = vunpack.c.h.b16 %v333
    %v1122 = vunpack.c.l.b16 %v334
    %v1123 = vunpack.c.h.b16 %v334
    %v1124 = vunpack.c.l.b16 %v335
    %v1125 = vunpack.c.h.b16 %v335
    %v1126 = vunpack.c.l.b16 %v336
    %v1127 = vunpack.c.h.b16 %v336
    %v1128 = vunpack.c.l.b16 %v337
    %v1129 = vunpack.c.h.b16 %v337
    %v1130 = vunpack.c.l.b16 %v338
    %v1131 = vunpack.c.h.b16 %v338
    %v1132 = vunpack.c.l.b16 %v339
    %v1133 = vunpack.c.h.b16 %v339
    %v1134 = vunpack.c.l.b16 %v340
    %v1135 = vunpack.c.h.b16 %v340
    %v1136 = vunpack.c.l.b16 %v341
    %v1137 = vunpack.c.h.b16 %v341
    %v1138 = vunpack.c.l.b16 %v342
    %v1139 = vunpack.c.h.b16 %v342
    %v1140 = vunpack.c.l.b16 %v343
    %v1141 = vunpack.c.h.b16 %v343
    %v1142 = vunpack.c.l.b16 %v344
    %v1143 = vunpack.c.h.b16 %v344
    %v1144 = vunpack.c.l.b16 %v345
    %v1145 = vunpack.c.h.b16 %v345
    %v1146 = vunpack.c.l.b16 %v346
    %v1147 = vunpack.c.h.b16 %v346
    %v1148 = vunpack.c.l.b16 %v347
    %v1149 = vunpack.c.h.b16 %v347
    %v1150 = vunpack.c.l.b16 %v348
    %v1151 = vunpack.c.h.b16 %v348
    %v1152 = vunpack.c.l.b16 %v349
    %v1153 = vunpack.c.h.b16 %v349
    %v1154 = vunpack.c.l.b16 %v350
    %v1155 = vunpack.c.h.b16 %v350
    %v1156 = vunpack.c.l.b16 %v351
    %v1157 = vunpack.c.h.b16 %v351
    %v1158 = vunpack.c.l.b16 %v352
    %v1159 = vunpack.c.h.b16 %v352
    %v1160 = vunpack.c.l.b16 %v353
    %v1161 = vunpack.c.h.b16 %v353
    %v1162 = vunpack.c.l.b16 %v354
    %v1163 = vunpack.c.h.b16 %v354
    %v1164 = vunpack.c.l.b16 %v355
    %v1165 = vunpack.c.h.b16 %v355
    %v1166 = vunpack.c.l.b16 %v356
    %v1167 = vunpack.c.h.b16 %v356
    %v1168 = vunpack.c.l.b16 %v357
    %v1169 = vunpack.c.h.b16 %v357
    %v1170 = vunpack.c.l.b16 %v358
    %v1171 = vunpack.c.h.b16 %v358
    %v1172 = vunpack.c.l.b16 %v359
    %v1173 = vunpack.c.h.b16 %v359
    %v1174 = vunpack.c.l.b16 %v360
    %v1175 = vunpack.c.h.b16 %v360
    %v1176 = vunpack.c.l.b16 %v361
    %v1177 = vunpack.c.h.b16 %v361
    %v1178 = vunpack.c.l.b16 %v362
    %v1179 = vunpack.c.h.b16 %v362
    %v1180 = vunpack.c.l.b16 %v363
    %v1181 = vunpack.c.h.b16 %v363
    %v1182 = vunpack.c.l.b16 %v364
    %v1183 = vunpack.c.h.b16 %v364
    %v1184 = vunpack.c.l.b16 %v365
    %v1185 = vunpack.c.h.b16 %v365
    %v1186 = vunpack.c.l.b16 %v366
    %v1187 = vunpack.c.h.b16 %v366
    %v1188 = vunpack.c.l.b16 %v367
    %v1189 = vunpack.c.h.b16 %v367
    %v1190 = vunpack.c.l.b16 %v368
    %v1191 = vunpack.c.h.b16 %v368
    %v1192 = vunpack.c.l.b16 %v369
    %v1193 = vunpack.c.h.b16 %v369
    %v1194 = vunpack.c.l.b16 %v370
    %v1195 = vunpack.c.h.b16 %v370
    %v1196 = vunpack.c.l.b16 %v371
    %v1197 = vunpack.c.h.b16 %v371
    %v1198 = vunpack.c.l.b16 %v372
    %v1199 = vunpack.c.h.b16 %v372
    %v1200 = vunpack.c.l.b16 %v373
    %v1201 = vunpack.c.h.b16 %v373
    %v1202 = vunpack.c.l.b16 %v374
    %v1203 = vunpack.c.h.b16 %v374
    %v1204 = vunpack.c.l.b16 %v375
    %v1205 = vunpack.c.h.b16 %v375
    %v1206 = vunpack.c.l.b16 %v376
    %v1207 = vunpack.c.h.b16 %v376
    %v1208 = vunpack.c.l.b16 %v377
    %v1209 = vunpack.c.h.b16 %v377
    %v1210 = vunpack.c.l.b16 %v378
    %v1211 = vunpack.c.h.b16 %v378
    %v1212 = vunpack.c.l.b16 %v379
    %v1213 = vunpack.c.h.b16 %v379
    %v1214 = vunpack.c.l.b16 %v380
    %v1215 = vunpack.c.h.b16 %v380
    %v1216 = vunpack.c.l.b16 %v381
    %v1217 = vunpack.c.h.b16 %v381
    %v1218 = vunpack.c.l.b16 %v382
    %v1219 = vunpack.c.h.b16 %v382
    %v1220 = vunpack.c.l.b16 %v383
    %v1221 = vunpack.c.h.b16 %v383
    %v1222 = vunpack.c.l.b16 %v384
    %v1223 = vunpack.c.h.b16 %v384
    %v1224 = vunpack.c.l.b16 %v385
    %v1225 = vunpack.c.h.b16 %v385
    %v1226 = vunpack.c.l.b16 %v386
    %v1227 = vunpack.c.h.b16 %v386
    %v1228 = vunpack.c.l.b16 %v387
    %v1229 = vunpack.c.h.b16 %v387
    %v1230 = vunpack.c.l.b16 %v388
    %v1231 = vunpack.c.h.b16 %v388
    %v1232 = vunpack.c.l.b16 %v389
    %v1233 = vunpack.c.h.b16 %v389
    %v1234 = vunpack.c.l.b16 %v390
    %v1235 = vunpack.c.h.b16 %v390
    %v1236 = vunpack.c.l.b16 %v391
    %v1237 = vunpack.c.h.b16 %v391
    %v1238 = vunpack.c.l.b16 %v392
    %v1239 = vunpack.c.h.b16 %v392
    %v1240 = vunpack.c.l.b16 %v393
    %v1241 = vunpack.c.h.b16 %v393
    %v1242 = vpack.c.b16 %v734, %v730
    %v1243 = vpack.c.b16 %v735, %v731
    %v1244 = vpack.c.b16 %v736, %v732
    %v1245 = vpack.c.b16 %v737, %v733
    %v1246 = vpack.c.b16 %v742, %v738
    %v1247 = vpack.c.b16 %v743, %v739
    %v1248 = vpack.c.b16 %v744, %v740
    %v1249 = vpack.c.b16 %v745, %v741
    %v1250 = vpack.c.b16 %v750, %v746
    %v1251 = vpack.c.b16 %v751, %v747
    %v1252 = vpack.c.b16 %v752, %v748
    %v1253 = vpack.c.b16 %v753, %v749
    %v1254 = vpack.c.b16 %v758, %v754
    %v1255 = vpack.c.b16 %v759, %v755
    %v1256 = vpack.c.b16 %v760, %v756
    %v1257 = vpack.c.b16 %v761, %v757
    %v1258 = vpack.c.b16 %v766, %v762
    %v1259 = vpack.c.b16 %v767, %v763
    %v1260 = vpack.c.b16 %v768, %v764
    %v1261 = vpack.c.b16 %v769, %v765
    %v1262 = vpack.c.b16 %v774, %v770
    %v1263 = vpack.c.b16 %v775, %v771
    %v1264 = vpack.c.b16 %v776, %v772
    %v1265 = vpack.c.b16 %v777, %v773
    %v1266 = vpack.c.b16 %v782, %v778
    %v1267 = vpack.c.b16 %v783, %v779
    %v1268 = vpack.c.b16 %v784, %v780
    %v1269 = vpack.c.b16 %v785, %v781
    %v1270 = vpack.c.b16 %v790, %v786
    %v1271 = vpack.c.b16 %v791, %v787
    %v1272 = vpack.c.b16 %v792, %v788
    %v1273 = vpack.c.b16 %v793, %v789
    %v1274 = vpack.c.b16 %v798, %v794
    %v1275 = vpack.c.b16 %v799, %v795
    %v1276 = vpack.c.b16 %v800, %v796
    %v1277 = vpack.c.b16 %v801, %v797
    %v1278 = vpack.c.b16 %v806, %v802
    %v1279 = vpack.c.b16 %v807, %v803
    %v1280 = vpack.c.b16 %v808, %v804
    %v1281 = vpack.c.b16 %v809, %v805
    %v1282 = vpack.c.b16 %v814, %v810
    %v1283 = vpack.c.b16 %v815, %v811
    %v1284 = vpack.c.b16 %v816, %v812
    %v1285 = vpack.c.b16 %v817, %v813
    %v1286 = vpack.c.b16 %v822, %v818
    %v1287 = vpack.c.b16 %v823, %v819
    %v1288 = vpack.c.b16 %v824, %v820
    %v1289 = vpack.c.b16 %v825, %v821
    %v1290 = vpack.c.b16 %v830, %v826
    %v1291 = vpack.c.b16 %v831, %v827
    %v1292 = vpack.c.b16 %v832, %v828
    %v1293 = vpack.c.b16 %v833, %v829
    %v1294 = vpack.c.b16 %v838, %v834
    %v1295 = vpack.c.b16 %v839, %v835
    %v1296 = vpack.c.b16 %v840, %v836
    %v1297 = vpack.c.b16 %v841, %v837
    %v1298 = vpack.c.b16 %v846, %v842
    %v1299 = vpack.c.b16 %v847, %v843
    %v1300 = vpack.c.b16 %v848, %v844
    %v1301 = vpack.c.b16 %v849, %v845
    %v1302 = vpack.c.b16 %v854, %v850
    %v1303 = vpack.c.b16 %v855, %v851
    %v1304 = vpack.c.b16 %v856, %v852
    %v1305 = vpack.c.b16 %v857, %v853
    %v1306 = vpack.c.b16 %v862, %v858
    %v1307 = vpack.c.b16 %v863, %v859
    %v1308 = vpack.c.b16 %v864, %v860
    %v1309 = vpack.c.b16 %v865, %v861
    %v1310 = vpack.c.b16 %v870, %v866
    %v1311 = vpack.c.b16 %v871, %v867
    %v1312 = vpack.c.b16 %v872, %v868
    %v1313 = vpack.c.b16 %v873, %v869
    %v1314 = vpack.c.b16 %v878, %v874
    %v1315 = vpack.c.b16 %v879, %v875
    %v1316 = vpack.c.b16 %v880, %v876
    %v1317 = vpack.c.b16 %v881, %v877
    %v1318 = vpack.c.b16 %v886, %v882
    %v1319 = vpack.c.b16 %v887, %v883
    %v1320 = vpack.c.b16 %v888, %v884
    %v1321 = vpack.c.b16 %v889, %v885
    %v1322 = vpack.c.b16 %v894, %v890
    %v1323 = vpack.c.b16 %v895, %v891
    %v1324 = vpack.c.b16 %v896, %v892
    %v1325 = vpack.c.b16 %v897, %v893
    %v1326 = vpack.c.b16 %v902, %v898
    %v1327 = vpack.c.b16 %v903, %v899
    %v1328 = vpack.c.b16 %v904, %v900
    %v1329 = vpack.c.b16 %v905, %v901
    %v1330 = vpack.c.b16 %v910, %v906
    %v1331 = vpack.c.b16 %v911, %v907
    %v1332 = vpack.c.b16 %v912, %v908
    %v1333 = vpack.c.b16 %v913, %v909
    %v1334 = vpack.c.b16 %v918, %v914
    %v1335 = vpack.c.b16 %v919, %v915
    %v1336 = vpack.c.b16 %v920, %v916
    %v1337 = vpack.c.b16 %v921, %v917
    %v1338 = vpack.c.b16 %v926, %v922
    %v1339 = vpack.c.b16 %v927, %v923
    %v1340 = vpack.c.b16 %v928, %v924
    %v1341 = vpack.c.b16 %v929, %v925
    %v1342 = vpack.c.b16 %v934, %v930
    %v1343 = vpack.c.b16 %v935, %v931
    %v1344 = vpack.c.b16 %v936, %v932
    %v1345 = vpack.c.b16 %v937, %v933
    %v1346 = vpack.c.b16 %v942, %v938
    %v1347 = vpack.c.b16 %v943, %v939
    %v1348 = vpack.c.b16 %v944, %v940
    %v1349 = vpack.c.b16 %v945, %v941
    %v1350 = vpack.c.b16 %v950, %v946
    %v1351 = vpack.c.b16 %v951, %v947
    %v1352 = vpack.c.b16 %v952, %v948
    %v1353 = vpack.c.b16 %v953, %v949
    %v1354 = vpack.c.b16 %v958, %v954
    %v1355 = vpack.c.b16 %v959, %v955
    %v1356 = vpack.c.b16 %v960, %v956
    %v1357 = vpack.c.b16 %v961, %v957
    %v1358 = vpack.c.b16 %v966, %v962
    %v1359 = vpack.c.b16 %v967, %v963
    %v1360 = vpack.c.b16 %v968, %v964
    %v1361 = vpack.c.b16 %v969, %v965
    %v1362 = vpack.c.b16 %v974, %v970
    %v1363 = vpack.c.b16 %v975, %v971
    %v1364 = vpack.c.b16 %v976, %v972
    %v1365 = vpack.c.b16 %v977, %v973
    %v1366 = vpack.c.b16 %v982, %v978
    %v1367 = vpack.c.b16 %v983, %v979
    %v1368 = vpack.c.b16 %v984, %v980
    %v1369 = vpack.c.b16 %v985, %v981
    %v1370 = vpack.c.b16 %v990, %v986
    %v1371 = vpack.c.b16 %v991, %v987
    %v1372 = vpack.c.b16 %v992, %v988
    %v1373 = vpack.c.b16 %v993, %v989
    %v1374 = vpack.c.b16 %v998, %v994
    %v1375 = vpack.c.b16 %v999, %v995
    %v1376 = vpack.c.b16 %v1000, %v996
    %v1377 = vpack.c.b16 %v1001, %v997
    %v1378 = vpack.c.b16 %v1006, %v1002
    %v1379 = vpack.c.b16 %v1007, %v1003
    %v1380 = vpack.c.b16 %v1008, %v1004
    %v1381 = vpack.c.b16 %v1009, %v1005
    %v1382 = vpack.c.b16 %v1014, %v1010
    %v1383 = vpack.c.b16 %v1015, %v1011
    %v1384 = vpack.c.b16 %v1016, %v1012
    %v1385 = vpack.c.b16 %v1017, %v1013
    %v1386 = vpack.c.b16 %v1022, %v1018
    %v1387 = vpack.c.b16 %v1023, %v1019
    %v1388 = vpack.c.b16 %v1024, %v1020
    %v1389 = vpack.c.b16 %v1025, %v1021
    %v1390 = vpack.c.b16 %v1030, %v1026
    %v1391 = vpack.c.b16 %v1031, %v1027
    %v1392 = vpack.c.b16 %v1032, %v1028
    %v1393 = vpack.c.b16 %v1033, %v1029
    %v1394 = vpack.c.b16 %v1038, %v1034
    %v1395 = vpack.c.b16 %v1039, %v1035
    %v1396 = vpack.c.b16 %v1040, %v1036
    %v1397 = vpack.c.b16 %v1041, %v1037
    %v1398 = vpack.c.b16 %v1046, %v1042
    %v1399 = vpack.c.b16 %v1047, %v1043
    %v1400 = vpack.c.b16 %v1048, %v1044
    %v1401 = vpack.c.b16 %v1049, %v1045
    %v1402 = vpack.c.b16 %v1054, %v1050
    %v1403 = vpack.c.b16 %v1055, %v1051
    %v1404 = vpack.c.b16 %v1056, %v1052
    %v1405 = vpack.c.b16 %v1057, %v1053
    %v1406 = vpack.c.b16 %v1062, %v1058
    %v1407 = vpack.c.b16 %v1063, %v1059
    %v1408 = vpack.c.b16 %v1064, %v1060
    %v1409 = vpack.c.b16 %v1065, %v1061
    %v1410 = vpack.c.b16 %v1070, %v1066
    %v1411 = vpack.c.b16 %v1071, %v1067
    %v1412 = vpack.c.b16 %v1072, %v1068
    %v1413 = vpack.c.b16 %v1073, %v1069
    %v1414 = vpack.c.b16 %v1078, %v1074
    %v1415 = vpack.c.b16 %v1079, %v1075
    %v1416 = vpack.c.b16 %v1080, %v1076
    %v1417 = vpack.c.b16 %v1081, %v1077
    %v1418 = vpack.c.b16 %v1086, %v1082
    %v1419 = vpack.c.b16 %v1087, %v1083
    %v1420 = vpack.c.b16 %v1088, %v1084
    %v1421 = vpack.c.b16 %v1089, %v1085
    %v1422 = vpack.c.b16 %v1094, %v1090
    %v1423 = vpack.c.b16 %v1095, %v1091
    %v1424 = vpack.c.b16 %v1096, %v1092
    %v1425 = vpack.c.b16 %v1097, %v1093
    %v1426 = vpack.c.b16 %v1102, %v1098
    %v1427 = vpack.c.b16 %v1103, %v1099
    %v1428 = vpack.c.b16 %v1104, %v1100
    %v1429 = vpack.c.b16 %v1105, %v1101
    %v1430 = vpack.c.b16 %v1110, %v1106
    %v1431 = vpack.c.b16 %v1111, %v1107
    %v1432 = vpack.c.b16 %v1112, %v1108
    %v1433 = vpack.c.b16 %v1113, %v1109
    %v1434 = vpack.c.b16 %v1118, %v1114
    %v1435 = vpack.c.b16 %v1119, %v1115
    %v1436 = vpack.c.b16 %v1120, %v1116
    %v1437 = vpack.c.b16 %v1121, %v1117
    %v1438 = vpack.c.b16 %v1126, %v1122
    %v1439 = vpack.c.b16 %v1127, %v1123
    %v1440 = vpack.c.b16 %v1128, %v1124
    %v1441 = vpack.c.b16 %v1129, %v1125
    %v1442 = vpack.c.b16 %v1134, %v1130
    %v1443 = vpack.c.b16 %v1135, %v1131
    %v1444 = vpack.c.b16 %v1136, %v1132
    %v1445 = vpack.c.b16 %v1137, %v1133
    %v1446 = vpack.c.b16 %v1142, %v1138
    %v1447 = vpack.c.b16 %v1143, %v1139
    %v1448 = vpack.c.b16 %v1144, %v1140
    %v1449 = vpack.c.b16 %v1145, %v1141
    %v1450 = vpack.c.b16 %v1150, %v1146
    %v1451 = vpack.c.b16 %v1151, %v1147
    %v1452 = vpack.c.b16 %v1152, %v1148
    %v1453 = vpack.c.b16 %v1153, %v1149
    %v1454 = vpack.c.b16 %v1158, %v1154
    %v1455 = vpack.c.b16 %v1159, %v1155
    %v1456 = vpack.c.b16 %v1160, %v1156
    %v1457 = vpack.c.b16 %v1161, %v1157
    %v1458 = vpack.c.b16 %v1166, %v1162
    %v1459 = vpack.c.b16 %v1167, %v1163
    %v1460 = vpack.c.b16 %v1168, %v1164
    %v1461 = vpack.c.b16 %v1169, %v1165
    %v1462 = vpack.c.b16 %v1174, %v1170
    %v1463 = vpack.c.b16 %v1175, %v1171
    %v1464 = vpack.c.b16 %v1176, %v1172
    %v1465 = vpack.c.b16 %v1177, %v1173
    %v1466 = vpack.c.b16 %v1182, %v1178
    %v1467 = vpack.c.b16 %v1183, %v1179
    %v1468 = vpack.c.b16 %v1184, %v1180
    %v1469 = vpack.c.b16 %v1185, %v1181
    %v1470 = vpack.c.b16 %v1190, %v1186
    %v1471 = vpack.c.b16 %v1191, %v1187
    %v1472 = vpack.c.b16 %v1192, %v1188
    %v1473 = vpack.c.b16 %v1193, %v1189
    %v1474 = vpack.c.b16 %v1198, %v1194
    %v1475 = vpack.c.b16 %v1199, %v1195
    %v1476 = vpack.c.b16 %v1200, %v1196
    %v1477 = vpack.c.b16 %v1201, %v1197
    %v1478 = vpack.c.b16 %v1206, %v1202
    %v1479 = vpack.c.b16 %v1207, %v1203
    %v1480 = vpack.c.b16 %v1208, %v1204
    %v1481 = vpack.c.b16 %v1209, %v1205
    %v1482 = vpack.c.b16 %v1214, %v1210
    %v1483 = vpack.c.b16 %v1215, %v1211
    %v1484 = vpack.c.b16 %v1216, %v1212
    %v1485 = vpack.c.b16 %v1217, %v1213
    %v1486 = vpack.c.b16 %v1222, %v1218
    %v1487 = vpack.c.b16 %v1223, %v1219
    %v1488 = vpack.c.b16 %v1224, %v1220
    %v1489 = vpack.c.b16 %v1225, %v1221
    %v1490 = vpack.c.b16 %v1230, %v1226
    %v1491 = vpack.c.b16 %v1231, %v1227
    %v1492 = vpack.c.b16 %v1232, %v1228
    %v1493 = vpack.c.b16 %v1233, %v1229
    %v1494 = vpack.c.b16 %v1238, %v1234
    %v1495 = vpack.c.b16 %v1239, %v1235
    %v1496 = vpack.c.b16 %v1240, %v1236
    %v1497 = vpack.c.b16 %v1241, %v1237
    %1754 = vmatprep.subr.bf16.mxu0 %v1271
    %1755 = vmatpush1.bf16.msra.mxu0 %v1270
    %1756 = vmatprep.subr.bf16.mxu0 %v1267
    %1757 = vmatpush1.bf16.msra.mxu0 %v1266
    %1758 = vmatprep.subr.bf16.mxu0 %v1263
    %1759 = vmatpush1.bf16.msra.mxu0 %v1262
    %1760 = vmatprep.subr.bf16.mxu0 %v1259
    %1761 = vmatpush1.bf16.msra.mxu0 %v1258
    %1762 = vmatprep.subr.bf16.mxu0 %v1255
    %1763 = vmatpush1.bf16.msra.mxu0 %v1254
    %1764 = vmatprep.subr.bf16.mxu0 %v1251
    %1765 = vmatpush1.bf16.msra.mxu0 %v1250
    %1766 = vmatprep.subr.bf16.mxu0 %v1247
    %1767 = vmatpush1.bf16.msra.mxu0 %v1246
    %1768 = vmatprep.subr.bf16.mxu0 %v1243
    %1769 = vmatpush1.bf16.msra.mxu0 %v1242
    %1770 = vmatprep.subr.bf16.mxu0 %v1303
    %1771 = vmatpush2.bf16.msra.mxu0 %v1302
    %1772 = vmatprep.subr.bf16.mxu0 %v1299
    %1773 = vmatpush2.bf16.msra.mxu0 %v1298
    %1774 = vmatprep.subr.bf16.mxu0 %v1295
    %1775 = vmatpush2.bf16.msra.mxu0 %v1294
    %1776 = vmatprep.subr.bf16.mxu0 %v1291
    %1777 = vmatpush2.bf16.msra.mxu0 %v1290
    %1778 = vmatprep.subr.bf16.mxu0 %v1287
    %1779 = vmatpush2.bf16.msra.mxu0 %v1286
    %1780 = vmatprep.subr.bf16.mxu0 %v1283
    %1781 = vmatpush2.bf16.msra.mxu0 %v1282
    %1782 = vmatprep.subr.bf16.mxu0 %v1279
    %1783 = vmatpush2.bf16.msra.mxu0 %v1278
    %1784 = vmatprep.subr.bf16.mxu0 %v1275
    %1785 = vmatpush2.bf16.msra.mxu0 %v1274
    %1786 = vmatprep.mubr.bf16.mxu0 %v454
    %1787 = vmatmul.mubr.bf16.gmra.mxu0 %v440
    %v1788 = vpop.f32.mrf.mxu0
    %v1789 = vadd.f32 %v399, %v1788
    %v1790 = vpop.f32.mrf.mxu0
    %v1791 = vadd.f32 %v403, %v1790
    %v1792 = vpop.f32.mrf.mxu0
    %v1793 = vpop.f32.mrf.mxu0
    %1794 = vdwg.mxu0
    %1795 = vmatprep.subr.bf16.mxu0 %v1335
    %1796 = vmatpush1.bf16.msra.mxu0 %v1334
    %1797 = vmatprep.subr.bf16.mxu0 %v1331
    %1798 = vmatpush1.bf16.msra.mxu0 %v1330
    %1799 = vmatprep.subr.bf16.mxu0 %v1327
    %1800 = vmatpush1.bf16.msra.mxu0 %v1326
    %1801 = vmatprep.subr.bf16.mxu0 %v1323
    %1802 = vmatpush1.bf16.msra.mxu0 %v1322
    %1803 = vmatprep.subr.bf16.mxu0 %v1319
    %1804 = vmatpush1.bf16.msra.mxu0 %v1318
    %1805 = vmatprep.subr.bf16.mxu0 %v1315
    %1806 = vmatpush1.bf16.msra.mxu0 %v1314
    %1807 = vmatprep.subr.bf16.mxu0 %v1311
    %1808 = vmatpush1.bf16.msra.mxu0 %v1310
    %1809 = vmatprep.subr.bf16.mxu0 %v1307
    %1810 = vmatpush1.bf16.msra.mxu0 %v1306
    %1811 = vmatprep.subr.bf16.mxu0 %v1367
    %1812 = vmatpush2.bf16.msra.mxu0 %v1366
    %1813 = vmatprep.subr.bf16.mxu0 %v1363
    %1814 = vmatpush2.bf16.msra.mxu0 %v1362
    %1815 = vmatprep.subr.bf16.mxu0 %v1359
    %1816 = vmatpush2.bf16.msra.mxu0 %v1358
    %1817 = vmatprep.subr.bf16.mxu0 %v1355
    %1818 = vmatpush2.bf16.msra.mxu0 %v1354
    %1819 = vmatprep.subr.bf16.mxu0 %v1351
    %1820 = vmatpush2.bf16.msra.mxu0 %v1350
    %1821 = vmatprep.subr.bf16.mxu0 %v1347
    %1822 = vmatpush2.bf16.msra.mxu0 %v1346
    %1823 = vmatprep.subr.bf16.mxu0 %v1343
    %1824 = vmatpush2.bf16.msra.mxu0 %v1342
    %1825 = vmatprep.subr.bf16.mxu0 %v1339
    %1826 = vmatpush2.bf16.msra.mxu0 %v1338
    %1827 = vmatprep.mubr.bf16.mxu0 %v464
    %1828 = vmatmul.mubr.bf16.gmra.mxu0 %v462
    %v1829 = vpop.f32.mrf.mxu0
    %v1830 = vadd.f32 %v1789, %v1829
    %v1831 = vpop.f32.mrf.mxu0
    %v1832 = vadd.f32 %v1791, %v1831
    %v1833 = vpop.f32.mrf.mxu0
    %v1834 = vpop.f32.mrf.mxu0
    %1835 = vdwg.mxu0
    %1836 = vmatprep.subr.bf16.mxu0 %v1399
    %1837 = vmatpush1.bf16.msra.mxu0 %v1398
    %1838 = vmatprep.subr.bf16.mxu0 %v1395
    %1839 = vmatpush1.bf16.msra.mxu0 %v1394
    %1840 = vmatprep.subr.bf16.mxu0 %v1391
    %1841 = vmatpush1.bf16.msra.mxu0 %v1390
    %1842 = vmatprep.subr.bf16.mxu0 %v1387
    %1843 = vmatpush1.bf16.msra.mxu0 %v1386
    %1844 = vmatprep.subr.bf16.mxu0 %v1383
    %1845 = vmatpush1.bf16.msra.mxu0 %v1382
    %1846 = vmatprep.subr.bf16.mxu0 %v1379
    %1847 = vmatpush1.bf16.msra.mxu0 %v1378
    %1848 = vmatprep.subr.bf16.mxu0 %v1375
    %1849 = vmatpush1.bf16.msra.mxu0 %v1374
    %1850 = vmatprep.subr.bf16.mxu0 %v1371
    %1851 = vmatpush1.bf16.msra.mxu0 %v1370
    %1852 = vmatprep.subr.bf16.mxu0 %v1431
    %1853 = vmatpush2.bf16.msra.mxu0 %v1430
    %1854 = vmatprep.subr.bf16.mxu0 %v1427
    %1855 = vmatpush2.bf16.msra.mxu0 %v1426
    %1856 = vmatprep.subr.bf16.mxu0 %v1423
    %1857 = vmatpush2.bf16.msra.mxu0 %v1422
    %1858 = vmatprep.subr.bf16.mxu0 %v1419
    %1859 = vmatpush2.bf16.msra.mxu0 %v1418
    %1860 = vmatprep.subr.bf16.mxu0 %v1415
    %1861 = vmatpush2.bf16.msra.mxu0 %v1414
    %1862 = vmatprep.subr.bf16.mxu0 %v1411
    %1863 = vmatpush2.bf16.msra.mxu0 %v1410
    %1864 = vmatprep.subr.bf16.mxu0 %v1407
    %1865 = vmatpush2.bf16.msra.mxu0 %v1406
    %1866 = vmatprep.subr.bf16.mxu0 %v1403
    %1867 = vmatpush2.bf16.msra.mxu0 %v1402
    %1868 = vmatprep.mubr.bf16.mxu0 %v461
    %1869 = vmatmul.mubr.bf16.gmra.mxu0 %v447
    %v1870 = vpop.f32.mrf.mxu0
    %v1871 = vadd.f32 %v1830, %v1870
    %v1872 = vpop.f32.mrf.mxu0
    %v1873 = vadd.f32 %v1832, %v1872
    %v1874 = vpop.f32.mrf.mxu0
    %v1875 = vpop.f32.mrf.mxu0
    %1876 = vdwg.mxu0
    %1877 = vmatprep.subr.bf16.mxu0 %v1463
    %1878 = vmatpush1.bf16.msra.mxu0 %v1462
    %1879 = vmatprep.subr.bf16.mxu0 %v1459
    %1880 = vmatpush1.bf16.msra.mxu0 %v1458
    %1881 = vmatprep.subr.bf16.mxu0 %v1455
    %1882 = vmatpush1.bf16.msra.mxu0 %v1454
    %1883 = vmatprep.subr.bf16.mxu0 %v1451
    %1884 = vmatpush1.bf16.msra.mxu0 %v1450
    %1885 = vmatprep.subr.bf16.mxu0 %v1447
    %1886 = vmatpush1.bf16.msra.mxu0 %v1446
    %1887 = vmatprep.subr.bf16.mxu0 %v1443
    %1888 = vmatpush1.bf16.msra.mxu0 %v1442
    %1889 = vmatprep.subr.bf16.mxu0 %v1439
    %1890 = vmatpush1.bf16.msra.mxu0 %v1438
    %1891 = vmatprep.subr.bf16.mxu0 %v1435
    %1892 = vmatpush1.bf16.msra.mxu0 %v1434
    %1893 = vmatprep.subr.bf16.mxu0 %v1495
    %1894 = vmatpush2.bf16.msra.mxu0 %v1494
    %1895 = vmatprep.subr.bf16.mxu0 %v1491
    %1896 = vmatpush2.bf16.msra.mxu0 %v1490
    %1897 = vmatprep.subr.bf16.mxu0 %v1487
    %1898 = vmatpush2.bf16.msra.mxu0 %v1486
    %1899 = vmatprep.subr.bf16.mxu0 %v1483
    %1900 = vmatpush2.bf16.msra.mxu0 %v1482
    %1901 = vmatprep.subr.bf16.mxu0 %v1479
    %1902 = vmatpush2.bf16.msra.mxu0 %v1478
    %1903 = vmatprep.subr.bf16.mxu0 %v1475
    %1904 = vmatpush2.bf16.msra.mxu0 %v1474
    %1905 = vmatprep.subr.bf16.mxu0 %v1471
    %1906 = vmatpush2.bf16.msra.mxu0 %v1470
    %1907 = vmatprep.subr.bf16.mxu0 %v1467
    %1908 = vmatpush2.bf16.msra.mxu0 %v1466
    %1909 = vmatprep.mubr.bf16.mxu0 %v465
    %1910 = vmatmul.mubr.bf16.gmra.mxu0 %v463
    %v1911 = vpop.f32.mrf.mxu0
    %v1912 = vadd.f32 %v1871, %v1911
    %v1913 = vpop.f32.mrf.mxu0
    %v1914 = vadd.f32 %v1873, %v1913
    %v1915 = vpop.f32.mrf.mxu0
    %v1916 = vpop.f32.mrf.mxu0
    %1917 = vdwg.mxu0
    %1918 = vmatprep.subr.bf16.mxu0 %v1273
    %1919 = vmatpush1.bf16.msra.mxu0 %v1272
    %1920 = vmatprep.subr.bf16.mxu0 %v1269
    %1921 = vmatpush1.bf16.msra.mxu0 %v1268
    %1922 = vmatprep.subr.bf16.mxu0 %v1265
    %1923 = vmatpush1.bf16.msra.mxu0 %v1264
    %1924 = vmatprep.subr.bf16.mxu0 %v1261
    %1925 = vmatpush1.bf16.msra.mxu0 %v1260
    %1926 = vmatprep.subr.bf16.mxu0 %v1257
    %1927 = vmatpush1.bf16.msra.mxu0 %v1256
    %1928 = vmatprep.subr.bf16.mxu0 %v1253
    %1929 = vmatpush1.bf16.msra.mxu0 %v1252
    %1930 = vmatprep.subr.bf16.mxu0 %v1249
    %1931 = vmatpush1.bf16.msra.mxu0 %v1248
    %1932 = vmatprep.subr.bf16.mxu0 %v1245
    %1933 = vmatpush1.bf16.msra.mxu0 %v1244
    %1934 = vmatprep.subr.bf16.mxu0 %v1305
    %1935 = vmatpush2.bf16.msra.mxu0 %v1304
    %1936 = vmatprep.subr.bf16.mxu0 %v1301
    %1937 = vmatpush2.bf16.msra.mxu0 %v1300
    %1938 = vmatprep.subr.bf16.mxu0 %v1297
    %1939 = vmatpush2.bf16.msra.mxu0 %v1296
    %1940 = vmatprep.subr.bf16.mxu0 %v1293
    %1941 = vmatpush2.bf16.msra.mxu0 %v1292
    %1942 = vmatprep.subr.bf16.mxu0 %v1289
    %1943 = vmatpush2.bf16.msra.mxu0 %v1288
    %1944 = vmatprep.subr.bf16.mxu0 %v1285
    %1945 = vmatpush2.bf16.msra.mxu0 %v1284
    %1946 = vmatprep.subr.bf16.mxu0 %v1281
    %1947 = vmatpush2.bf16.msra.mxu0 %v1280
    %1948 = vmatprep.subr.bf16.mxu0 %v1277
    %1949 = vmatpush2.bf16.msra.mxu0 %v1276
    %1950 = vmatprep.mubr.bf16.mxu0 %v454
    %1951 = vmatmul.mubr.bf16.gmra.mxu0 %v440
    %v1952 = vpop.f32.mrf.mxu0
    %v1953 = vadd.f32 %v407, %v1952
    %v1954 = vpop.f32.mrf.mxu0
    %v1955 = vadd.f32 %v411, %v1954
    %v1956 = vpop.f32.mrf.mxu0
    %v1957 = vpop.f32.mrf.mxu0
    %1958 = vdwg.mxu0
    %1959 = vmatprep.subr.bf16.mxu0 %v1337
    %1960 = vmatpush1.bf16.msra.mxu0 %v1336
    %1961 = vmatprep.subr.bf16.mxu0 %v1333
    %1962 = vmatpush1.bf16.msra.mxu0 %v1332
    %1963 = vmatprep.subr.bf16.mxu0 %v1329
    %1964 = vmatpush1.bf16.msra.mxu0 %v1328
    %1965 = vmatprep.subr.bf16.mxu0 %v1325
    %1966 = vmatpush1.bf16.msra.mxu0 %v1324
    %1967 = vmatprep.subr.bf16.mxu0 %v1321
    %1968 = vmatpush1.bf16.msra.mxu0 %v1320
    %1969 = vmatprep.subr.bf16.mxu0 %v1317
    %1970 = vmatpush1.bf16.msra.mxu0 %v1316
    %1971 = vmatprep.subr.bf16.mxu0 %v1313
    %1972 = vmatpush1.bf16.msra.mxu0 %v1312
    %1973 = vmatprep.subr.bf16.mxu0 %v1309
    %1974 = vmatpush1.bf16.msra.mxu0 %v1308
    %1975 = vmatprep.subr.bf16.mxu0 %v1369
    %1976 = vmatpush2.bf16.msra.mxu0 %v1368
    %1977 = vmatprep.subr.bf16.mxu0 %v1365
    %1978 = vmatpush2.bf16.msra.mxu0 %v1364
    %1979 = vmatprep.subr.bf16.mxu0 %v1361
    %1980 = vmatpush2.bf16.msra.mxu0 %v1360
    %1981 = vmatprep.subr.bf16.mxu0 %v1357
    %1982 = vmatpush2.bf16.msra.mxu0 %v1356
    %1983 = vmatprep.subr.bf16.mxu0 %v1353
    %1984 = vmatpush2.bf16.msra.mxu0 %v1352
    %1985 = vmatprep.subr.bf16.mxu0 %v1349
    %1986 = vmatpush2.bf16.msra.mxu0 %v1348
    %1987 = vmatprep.subr.bf16.mxu0 %v1345
    %1988 = vmatpush2.bf16.msra.mxu0 %v1344
    %1989 = vmatprep.subr.bf16.mxu0 %v1341
    %1990 = vmatpush2.bf16.msra.mxu0 %v1340
    %1991 = vmatprep.mubr.bf16.mxu0 %v464
    %1992 = vmatmul.mubr.bf16.gmra.mxu0 %v462
    %v1993 = vpop.f32.mrf.mxu0
    %v1994 = vadd.f32 %v1953, %v1993
    %v1995 = vpop.f32.mrf.mxu0
    %v1996 = vadd.f32 %v1955, %v1995
    %v1997 = vpop.f32.mrf.mxu0
    %v1998 = vpop.f32.mrf.mxu0
    %1999 = vdwg.mxu0
    %2000 = vmatprep.subr.bf16.mxu0 %v1401
    %2001 = vmatpush1.bf16.msra.mxu0 %v1400
    %2002 = vmatprep.subr.bf16.mxu0 %v1397
    %2003 = vmatpush1.bf16.msra.mxu0 %v1396
    %2004 = vmatprep.subr.bf16.mxu0 %v1393
    %2005 = vmatpush1.bf16.msra.mxu0 %v1392
    %2006 = vmatprep.subr.bf16.mxu0 %v1389
    %2007 = vmatpush1.bf16.msra.mxu0 %v1388
    %2008 = vmatprep.subr.bf16.mxu0 %v1385
    %2009 = vmatpush1.bf16.msra.mxu0 %v1384
    %2010 = vmatprep.subr.bf16.mxu0 %v1381
    %2011 = vmatpush1.bf16.msra.mxu0 %v1380
    %2012 = vmatprep.subr.bf16.mxu0 %v1377
    %2013 = vmatpush1.bf16.msra.mxu0 %v1376
    %2014 = vmatprep.subr.bf16.mxu0 %v1373
    %2015 = vmatpush1.bf16.msra.mxu0 %v1372
    %2016 = vmatprep.subr.bf16.mxu0 %v1433
    %2017 = vmatpush2.bf16.msra.mxu0 %v1432
    %2018 = vmatprep.subr.bf16.mxu0 %v1429
    %2019 = vmatpush2.bf16.msra.mxu0 %v1428
    %2020 = vmatprep.subr.bf16.mxu0 %v1425
    %2021 = vmatpush2.bf16.msra.mxu0 %v1424
    %2022 = vmatprep.subr.bf16.mxu0 %v1421
    %2023 = vmatpush2.bf16.msra.mxu0 %v1420
    %2024 = vmatprep.subr.bf16.mxu0 %v1417
    %2025 = vmatpush2.bf16.msra.mxu0 %v1416
    %2026 = vmatprep.subr.bf16.mxu0 %v1413
    %2027 = vmatpush2.bf16.msra.mxu0 %v1412
    %2028 = vmatprep.subr.bf16.mxu0 %v1409
    %2029 = vmatpush2.bf16.msra.mxu0 %v1408
    %2030 = vmatprep.subr.bf16.mxu0 %v1405
    %2031 = vmatpush2.bf16.msra.mxu0 %v1404
    %2032 = vmatprep.mubr.bf16.mxu0 %v461
    %2033 = vmatmul.mubr.bf16.gmra.mxu0 %v447
    %v2034 = vpop.f32.mrf.mxu0
    %v2035 = vadd.f32 %v1994, %v2034
    %v2036 = vpop.f32.mrf.mxu0
    %v2037 = vadd.f32 %v1996, %v2036
    %v2038 = vpop.f32.mrf.mxu0
    %v2039 = vpop.f32.mrf.mxu0
    %2040 = vdwg.mxu0
    %2041 = vmatprep.subr.bf16.mxu0 %v1465
    %2042 = vmatpush1.bf16.msra.mxu0 %v1464
    %2043 = vmatprep.subr.bf16.mxu0 %v1461
    %2044 = vmatpush1.bf16.msra.mxu0 %v1460
    %2045 = vmatprep.subr.bf16.mxu0 %v1457
    %2046 = vmatpush1.bf16.msra.mxu0 %v1456
    %2047 = vmatprep.subr.bf16.mxu0 %v1453
    %2048 = vmatpush1.bf16.msra.mxu0 %v1452
    %2049 = vmatprep.subr.bf16.mxu0 %v1449
    %2050 = vmatpush1.bf16.msra.mxu0 %v1448
    %2051 = vmatprep.subr.bf16.mxu0 %v1445
    %2052 = vmatpush1.bf16.msra.mxu0 %v1444
    %2053 = vmatprep.subr.bf16.mxu0 %v1441
    %2054 = vmatpush1.bf16.msra.mxu0 %v1440
    %2055 = vmatprep.subr.bf16.mxu0 %v1437
    %2056 = vmatpush1.bf16.msra.mxu0 %v1436
    %2057 = vmatprep.subr.bf16.mxu0 %v1497
    %2058 = vmatpush2.bf16.msra.mxu0 %v1496
    %2059 = vmatprep.subr.bf16.mxu0 %v1493
    %2060 = vmatpush2.bf16.msra.mxu0 %v1492
    %2061 = vmatprep.subr.bf16.mxu0 %v1489
    %2062 = vmatpush2.bf16.msra.mxu0 %v1488
    %2063 = vmatprep.subr.bf16.mxu0 %v1485
    %2064 = vmatpush2.bf16.msra.mxu0 %v1484
    %2065 = vmatprep.subr.bf16.mxu0 %v1481
    %2066 = vmatpush2.bf16.msra.mxu0 %v1480
    %2067 = vmatprep.subr.bf16.mxu0 %v1477
    %2068 = vmatpush2.bf16.msra.mxu0 %v1476
    %2069 = vmatprep.subr.bf16.mxu0 %v1473
    %2070 = vmatpush2.bf16.msra.mxu0 %v1472
    %2071 = vmatprep.subr.bf16.mxu0 %v1469
    %2072 = vmatpush2.bf16.msra.mxu0 %v1468
    %2073 = vmatprep.mubr.bf16.mxu0 %v465
    %2074 = vmatmul.mubr.bf16.gmra.mxu0 %v463
    %v2075 = vpop.f32.mrf.mxu0
    %v2076 = vadd.f32 %v2035, %v2075
    %v2077 = vpop.f32.mrf.mxu0
    %v2078 = vadd.f32 %v2037, %v2077
    %v2079 = vpop.f32.mrf.mxu0
    %v2080 = vpop.f32.mrf.mxu0
    %2081 = vdwg.mxu0
    %v2082 = vmax.f32 %v1912, 0.0
    %v2083 = vmax.f32 %v1914, 0.0
    %v2084 = vmax.f32 %v2076, 0.0
    %v2085 = vmax.f32 %v2078, 0.0
    %v2086 = vpack.c.bf16 %v2082, %v2082
    %v2087 = vpack.c.bf16 %v2083, %v2083
    %v2088 = vpack.c.bf16 %v2084, %v2084
    %v2089 = vpack.c.bf16 %v2085, %v2085
    %v2090 = vld [vmem:[#allocation8] sm:$0xf]
    %v2091 = vld [vmem:[#allocation8 + $0x4] sm:$0xf]
    %v2092 = vld [vmem:[#allocation8 + $0x8] sm:$0xf]
    %v2093 = vld [vmem:[#allocation8 + $0xc] sm:$0xf]
    %v2094 = vld [vmem:[#allocation8 + $0x10] sm:$0xf]
    %v2095 = vld [vmem:[#allocation8 + $0x14] sm:$0xf]
    %v2096 = vld [vmem:[#allocation8 + $0x18] sm:$0xf]
    %v2097 = vld [vmem:[#allocation8 + $0x1c] sm:$0xf]
    %v2098 = vld [vmem:[#allocation8 + $0x20] sm:$0xf]
    %v2099 = vld [vmem:[#allocation8 + $0x24] sm:$0xf]
    %v2100 = vld [vmem:[#allocation8 + $0x28] sm:$0xf]
    %v2101 = vld [vmem:[#allocation8 + $0x2c] sm:$0xf]
    %v2102 = vld [vmem:[#allocation8 + $0x30] sm:$0xf]
    %v2103 = vld [vmem:[#allocation8 + $0x34] sm:$0xf]
    %v2104 = vld [vmem:[#allocation8 + $0x38] sm:$0xf]
    %v2105 = vld [vmem:[#allocation8 + $0x3c] sm:$0xf]
    %v2106 = vld [vmem:[#allocation8 + $0x40] sm:$0xf]
    %v2107 = vld [vmem:[#allocation8 + $0x44] sm:$0xf]
    %v2108 = vld [vmem:[#allocation8 + $0x48] sm:$0xf]
    %v2109 = vld [vmem:[#allocation8 + $0x4c] sm:$0xf]
    %v2110 = vld [vmem:[#allocation8 + $0x50] sm:$0xf]
    %v2111 = vld [vmem:[#allocation8 + $0x54] sm:$0xf]
    %v2112 = vld [vmem:[#allocation8 + $0x58] sm:$0xf]
    %v2113 = vld [vmem:[#allocation8 + $0x5c] sm:$0xf]
    %v2114 = vld [vmem:[#allocation8 + $0x60] sm:$0xf]
    %v2115 = vld [vmem:[#allocation8 + $0x64] sm:$0xf]
    %v2116 = vld [vmem:[#allocation8 + $0x68] sm:$0xf]
    %v2117 = vld [vmem:[#allocation8 + $0x6c] sm:$0xf]
    %v2118 = vld [vmem:[#allocation8 + $0x70] sm:$0xf]
    %v2119 = vld [vmem:[#allocation8 + $0x74] sm:$0xf]
    %v2120 = vld [vmem:[#allocation8 + $0x78] sm:$0xf]
    %v2121 = vld [vmem:[#allocation8 + $0x7c] sm:$0xf]
    %v2122 = vld [vmem:[#allocation8 + $0x80] sm:$0xf]
    %v2123 = vld [vmem:[#allocation8 + $0x84] sm:$0xf]
    %v2124 = vld [vmem:[#allocation8 + $0x88] sm:$0xf]
    %v2125 = vld [vmem:[#allocation8 + $0x8c] sm:$0xf]
    %v2126 = vld [vmem:[#allocation8 + $0x90] sm:$0xf]
    %v2127 = vld [vmem:[#allocation8 + $0x94] sm:$0xf]
    %v2128 = vld [vmem:[#allocation8 + $0x98] sm:$0xf]
    %v2129 = vld [vmem:[#allocation8 + $0x9c] sm:$0xf]
    %v2130 = vld [vmem:[#allocation8 + $0xa0] sm:$0xf]
    %v2131 = vld [vmem:[#allocation8 + $0xa4] sm:$0xf]
    %v2132 = vld [vmem:[#allocation8 + $0xa8] sm:$0xf]
    %v2133 = vld [vmem:[#allocation8 + $0xac] sm:$0xf]
    %v2134 = vld [vmem:[#allocation8 + $0xb0] sm:$0xf]
    %v2135 = vld [vmem:[#allocation8 + $0xb4] sm:$0xf]
    %v2136 = vld [vmem:[#allocation8 + $0xb8] sm:$0xf]
    %v2137 = vld [vmem:[#allocation8 + $0xbc] sm:$0xf]
    %v2138 = vld [vmem:[#allocation8 + $0xc0] sm:$0xf]
    %v2139 = vld [vmem:[#allocation8 + $0xc4] sm:$0xf]
    %v2140 = vld [vmem:[#allocation8 + $0xc8] sm:$0xf]
    %v2141 = vld [vmem:[#allocation8 + $0xcc] sm:$0xf]
    %v2142 = vld [vmem:[#allocation8 + $0xd0] sm:$0xf]
    %v2143 = vld [vmem:[#allocation8 + $0xd4] sm:$0xf]
    %v2144 = vld [vmem:[#allocation8 + $0xd8] sm:$0xf]
    %v2145 = vld [vmem:[#allocation8 + $0xdc] sm:$0xf]
    %v2146 = vld [vmem:[#allocation8 + $0xe0] sm:$0xf]
    %v2147 = vld [vmem:[#allocation8 + $0xe4] sm:$0xf]
    %v2148 = vld [vmem:[#allocation8 + $0xe8] sm:$0xf]
    %v2149 = vld [vmem:[#allocation8 + $0xec] sm:$0xf]
    %v2150 = vld [vmem:[#allocation8 + $0xf0] sm:$0xf]
    %v2151 = vld [vmem:[#allocation8 + $0xf4] sm:$0xf]
    %v2152 = vld [vmem:[#allocation8 + $0xf8] sm:$0xf]
    %v2153 = vld [vmem:[#allocation8 + $0xfc] sm:$0xf]
    %v2154 = vld [vmem:[%s5] sm:$0x1]
    %v2156 = vlaneseq
    %v2157 = vshrl.u32 %v2156, 7
    %v2158 = vsub.s32 0, %v2157
    %v2159 = vrot.slane %v2154, %v2158
    %v2225 = vunpack.c.l.b16 %v2090
    %v2226 = vunpack.c.l.b16 %v2091
    %v2227 = vunpack.c.l.b16 %v2092
    %v2228 = vunpack.c.l.b16 %v2093
    %v2229 = vunpack.c.l.b16 %v2094
    %v2230 = vunpack.c.l.b16 %v2095
    %v2231 = vunpack.c.l.b16 %v2096
    %v2232 = vunpack.c.l.b16 %v2097
    %v2233 = vunpack.c.l.b16 %v2098
    %v2234 = vunpack.c.l.b16 %v2099
    %v2235 = vunpack.c.l.b16 %v2100
    %v2236 = vunpack.c.l.b16 %v2101
    %v2237 = vunpack.c.l.b16 %v2102
    %v2238 = vunpack.c.l.b16 %v2103
    %v2239 = vunpack.c.l.b16 %v2104
    %v2240 = vunpack.c.l.b16 %v2105
    %v2241 = vunpack.c.l.b16 %v2106
    %v2242 = vunpack.c.l.b16 %v2107
    %v2243 = vunpack.c.l.b16 %v2108
    %v2244 = vunpack.c.l.b16 %v2109
    %v2245 = vunpack.c.l.b16 %v2110
    %v2246 = vunpack.c.l.b16 %v2111
    %v2247 = vunpack.c.l.b16 %v2112
    %v2248 = vunpack.c.l.b16 %v2113
    %v2249 = vunpack.c.l.b16 %v2114
    %v2250 = vunpack.c.l.b16 %v2115
    %v2251 = vunpack.c.l.b16 %v2116
    %v2252 = vunpack.c.l.b16 %v2117
    %v2253 = vunpack.c.l.b16 %v2118
    %v2254 = vunpack.c.l.b16 %v2119
    %v2255 = vunpack.c.l.b16 %v2120
    %v2256 = vunpack.c.l.b16 %v2121
    %v2257 = vunpack.c.l.b16 %v2122
    %v2258 = vunpack.c.l.b16 %v2123
    %v2259 = vunpack.c.l.b16 %v2124
    %v2260 = vunpack.c.l.b16 %v2125
    %v2261 = vunpack.c.l.b16 %v2126
    %v2262 = vunpack.c.l.b16 %v2127
    %v2263 = vunpack.c.l.b16 %v2128
    %v2264 = vunpack.c.l.b16 %v2129
    %v2265 = vunpack.c.l.b16 %v2130
    %v2266 = vunpack.c.l.b16 %v2131
    %v2267 = vunpack.c.l.b16 %v2132
    %v2268 = vunpack.c.l.b16 %v2133
    %v2269 = vunpack.c.l.b16 %v2134
    %v2270 = vunpack.c.l.b16 %v2135
    %v2271 = vunpack.c.l.b16 %v2136
    %v2272 = vunpack.c.l.b16 %v2137
    %v2273 = vunpack.c.l.b16 %v2138
    %v2274 = vunpack.c.l.b16 %v2139
    %v2275 = vunpack.c.l.b16 %v2140
    %v2276 = vunpack.c.l.b16 %v2141
    %v2277 = vunpack.c.l.b16 %v2142
    %v2278 = vunpack.c.l.b16 %v2143
    %v2279 = vunpack.c.l.b16 %v2144
    %v2280 = vunpack.c.l.b16 %v2145
    %v2281 = vunpack.c.l.b16 %v2146
    %v2282 = vunpack.c.l.b16 %v2147
    %v2283 = vunpack.c.l.b16 %v2148
    %v2284 = vunpack.c.l.b16 %v2149
    %v2285 = vunpack.c.l.b16 %v2150
    %v2286 = vunpack.c.l.b16 %v2151
    %v2287 = vunpack.c.l.b16 %v2152
    %v2288 = vunpack.c.l.b16 %v2153
    %v2289 = vpack.c.b16 %v2226, %v2225
    %v2290 = vpack.c.b16 %v2228, %v2227
    %v2291 = vpack.c.b16 %v2230, %v2229
    %v2292 = vpack.c.b16 %v2232, %v2231
    %v2293 = vpack.c.b16 %v2234, %v2233
    %v2294 = vpack.c.b16 %v2236, %v2235
    %v2295 = vpack.c.b16 %v2238, %v2237
    %v2296 = vpack.c.b16 %v2240, %v2239
    %v2297 = vpack.c.b16 %v2242, %v2241
    %v2298 = vpack.c.b16 %v2244, %v2243
    %v2299 = vpack.c.b16 %v2246, %v2245
    %v2300 = vpack.c.b16 %v2248, %v2247
    %v2301 = vpack.c.b16 %v2250, %v2249
    %v2302 = vpack.c.b16 %v2252, %v2251
    %v2303 = vpack.c.b16 %v2254, %v2253
    %v2304 = vpack.c.b16 %v2256, %v2255
    %v2305 = vpack.c.b16 %v2258, %v2257
    %v2306 = vpack.c.b16 %v2260, %v2259
    %v2307 = vpack.c.b16 %v2262, %v2261
    %v2308 = vpack.c.b16 %v2264, %v2263
    %v2309 = vpack.c.b16 %v2266, %v2265
    %v2310 = vpack.c.b16 %v2268, %v2267
    %v2311 = vpack.c.b16 %v2270, %v2269
    %v2312 = vpack.c.b16 %v2272, %v2271
    %v2313 = vpack.c.b16 %v2274, %v2273
    %v2314 = vpack.c.b16 %v2276, %v2275
    %v2315 = vpack.c.b16 %v2278, %v2277
    %v2316 = vpack.c.b16 %v2280, %v2279
    %v2317 = vpack.c.b16 %v2282, %v2281
    %v2318 = vpack.c.b16 %v2284, %v2283
    %v2319 = vpack.c.b16 %v2286, %v2285
    %v2320 = vpack.c.b16 %v2288, %v2287
    %2353 = vmatprep.subr.bf16.mxu0 0
    %2354 = vmatpush1.bf16.msra.mxu0 %v2296
    %2355 = vmatprep.subr.bf16.mxu0 0
    %2356 = vmatpush1.bf16.msra.mxu0 %v2295
    %2357 = vmatprep.subr.bf16.mxu0 0
    %2358 = vmatpush1.bf16.msra.mxu0 %v2294
    %2359 = vmatprep.subr.bf16.mxu0 0
    %2360 = vmatpush1.bf16.msra.mxu0 %v2293
    %2361 = vmatprep.subr.bf16.mxu0 0
    %2362 = vmatpush1.bf16.msra.mxu0 %v2292
    %2363 = vmatprep.subr.bf16.mxu0 0
    %2364 = vmatpush1.bf16.msra.mxu0 %v2291
    %2365 = vmatprep.subr.bf16.mxu0 0
    %2366 = vmatpush1.bf16.msra.mxu0 %v2290
    %2367 = vmatprep.subr.bf16.mxu0 0
    %2368 = vmatpush1.bf16.msra.mxu0 %v2289
    %2369 = vmatprep.subr.bf16.mxu0 0
    %2370 = vmatpush2.bf16.msra.mxu0 %v2304
    %2371 = vmatprep.subr.bf16.mxu0 0
    %2372 = vmatpush2.bf16.msra.mxu0 %v2303
    %2373 = vmatprep.subr.bf16.mxu0 0
    %2374 = vmatpush2.bf16.msra.mxu0 %v2302
    %2375 = vmatprep.subr.bf16.mxu0 0
    %2376 = vmatpush2.bf16.msra.mxu0 %v2301
    %2377 = vmatprep.subr.bf16.mxu0 0
    %2378 = vmatpush2.bf16.msra.mxu0 %v2300
    %2379 = vmatprep.subr.bf16.mxu0 0
    %2380 = vmatpush2.bf16.msra.mxu0 %v2299
    %2381 = vmatprep.subr.bf16.mxu0 0
    %2382 = vmatpush2.bf16.msra.mxu0 %v2298
    %2383 = vmatprep.subr.bf16.mxu0 0
    %2384 = vmatpush2.bf16.msra.mxu0 %v2297
    %2385 = vmatprep.mubr.bf16.mxu0 %v2087
    %2386 = vmatmul.mubr.bf16.gmra.mxu0 %v2086
    %v2387 = vpop.f32.mrf.mxu0
    %v2388 = vadd.f32 %v2159, %v2387
    %v2389 = vpop.f32.mrf.mxu0
    %v2390 = vpop.f32.mrf.mxu0
    %v2391 = vpop.f32.mrf.mxu0
    %2392 = vdwg.mxu0
    %2393 = vmatprep.subr.bf16.mxu0 0
    %2394 = vmatpush1.bf16.msra.mxu0 %v2312
    %2395 = vmatprep.subr.bf16.mxu0 0
    %2396 = vmatpush1.bf16.msra.mxu0 %v2311
    %2397 = vmatprep.subr.bf16.mxu0 0
    %2398 = vmatpush1.bf16.msra.mxu0 %v2310
    %2399 = vmatprep.subr.bf16.mxu0 0
    %2400 = vmatpush1.bf16.msra.mxu0 %v2309
    %2401 = vmatprep.subr.bf16.mxu0 0
    %2402 = vmatpush1.bf16.msra.mxu0 %v2308
    %2403 = vmatprep.subr.bf16.mxu0 0
    %2404 = vmatpush1.bf16.msra.mxu0 %v2307
    %2405 = vmatprep.subr.bf16.mxu0 0
    %2406 = vmatpush1.bf16.msra.mxu0 %v2306
    %2407 = vmatprep.subr.bf16.mxu0 0
    %2408 = vmatpush1.bf16.msra.mxu0 %v2305
    %2409 = vmatprep.subr.bf16.mxu0 0
    %2410 = vmatpush2.bf16.msra.mxu0 %v2320
    %2411 = vmatprep.subr.bf16.mxu0 0
    %2412 = vmatpush2.bf16.msra.mxu0 %v2319
    %2413 = vmatprep.subr.bf16.mxu0 0
    %2414 = vmatpush2.bf16.msra.mxu0 %v2318
    %2415 = vmatprep.subr.bf16.mxu0 0
    %2416 = vmatpush2.bf16.msra.mxu0 %v2317
    %2417 = vmatprep.subr.bf16.mxu0 0
    %2418 = vmatpush2.bf16.msra.mxu0 %v2316
    %2419 = vmatprep.subr.bf16.mxu0 0
    %2420 = vmatpush2.bf16.msra.mxu0 %v2315
    %2421 = vmatprep.subr.bf16.mxu0 0
    %2422 = vmatpush2.bf16.msra.mxu0 %v2314
    %2423 = vmatprep.subr.bf16.mxu0 0
    %2424 = vmatpush2.bf16.msra.mxu0 %v2313
    %2425 = vmatprep.mubr.bf16.mxu0 %v2089
    %2426 = vmatmul.mubr.bf16.gmra.mxu0 %v2088
    %v2427 = vpop.f32.mrf.mxu0
    %v2428 = vadd.f32 %v2388, %v2427
    %v2429 = vpop.f32.mrf.mxu0
    %v2430 = vpop.f32.mrf.mxu0
    %v2431 = vpop.f32.mrf.mxu0
    %2432 = vdwg.mxu0
    %v2433 = vmax.f32 %v2428, 0.0
    %v2434 = vld [vmem:[#allocation5] sm:$0x3]
    %v2435 = vpack.c.bf16 %v2433, %v2433
    %v2436 = vpack.c.bf16 %v2434, %v2434
    %v2437 = vld [vmem:[#allocation10] sm:$0xff]
    %v2438 = vld [vmem:[#allocation10 + $0x8] sm:$0xff]
    %v2439 = vld [vmem:[#allocation10 + $0x10] sm:$0xff]
    %v2440 = vld [vmem:[#allocation10 + $0x18] sm:$0xff]
    %v2441 = vld [vmem:[#allocation10 + $0x20] sm:$0xff]
    %v2442 = vld [vmem:[#allocation10 + $0x28] sm:$0xff]
    %v2443 = vld [vmem:[#allocation10 + $0x30] sm:$0xff]
    %v2444 = vld [vmem:[#allocation10 + $0x38] sm:$0xff]
    %v2445 = vld [vmem:[#allocation10 + $0x40] sm:$0xff]
    %v2446 = vld [vmem:[#allocation10 + $0x48] sm:$0xff]
    %v2447 = vld [vmem:[#allocation10 + $0x50] sm:$0xff]
    %v2448 = vld [vmem:[#allocation10 + $0x58] sm:$0xff]
    %v2449 = vld [vmem:[#allocation10 + $0x60] sm:$0xff]
    %v2450 = vld [vmem:[#allocation10 + $0x68] sm:$0xff]
    %v2451 = vld [vmem:[#allocation10 + $0x70] sm:$0xff]
    %v2452 = vld [vmem:[#allocation10 + $0x78] sm:$0xff]
    %v2453 = vld [vmem:[#allocation10 + $0x80] sm:$0xff]
    %v2454 = vld [vmem:[#allocation10 + $0x88] sm:$0xff]
    %v2455 = vld [vmem:[#allocation10 + $0x90] sm:$0xff]
    %v2456 = vld [vmem:[#allocation10 + $0x98] sm:$0xff]
    %v2457 = vld [vmem:[#allocation10 + $0xa0] sm:$0xff]
    %v2458 = vld [vmem:[#allocation10 + $0xa8] sm:$0xff]
    %v2459 = vld [vmem:[#allocation10 + $0xb0] sm:$0xff]
    %v2460 = vld [vmem:[#allocation10 + $0xb8] sm:$0xff]
    %v2461 = vld [vmem:[#allocation10 + $0xc0] sm:$0xff]
    %v2462 = vld [vmem:[#allocation10 + $0xc8] sm:$0xff]
    %v2463 = vld [vmem:[#allocation10 + $0xd0] sm:$0xff]
    %v2464 = vld [vmem:[#allocation10 + $0xd8] sm:$0xff]
    %v2465 = vld [vmem:[#allocation10 + $0xe0] sm:$0xff]
    %v2466 = vld [vmem:[#allocation10 + $0xe8] sm:$0xff]
    %v2467 = vld [vmem:[#allocation10 + $0xf0] sm:$0xff]
    %v2468 = vld [vmem:[#allocation10 + $0xf8] sm:$0xff]
    %v2469 = vld [vmem:[#allocation10 + $0x100] sm:$0xff]
    %v2470 = vld [vmem:[#allocation10 + $0x108] sm:$0xff]
    %v2471 = vld [vmem:[#allocation10 + $0x110] sm:$0xff]
    %v2472 = vld [vmem:[#allocation10 + $0x118] sm:$0xff]
    %v2473 = vld [vmem:[#allocation10 + $0x120] sm:$0xff]
    %v2474 = vld [vmem:[#allocation10 + $0x128] sm:$0xff]
    %v2475 = vld [vmem:[#allocation10 + $0x130] sm:$0xff]
    %v2476 = vld [vmem:[#allocation10 + $0x138] sm:$0xff]
    %v2477 = vld [vmem:[#allocation10 + $0x140] sm:$0xff]
    %v2478 = vld [vmem:[#allocation10 + $0x148] sm:$0xff]
    %v2479 = vld [vmem:[#allocation10 + $0x150] sm:$0xff]
    %v2480 = vld [vmem:[#allocation10 + $0x158] sm:$0xff]
    %v2481 = vld [vmem:[#allocation10 + $0x160] sm:$0xff]
    %v2482 = vld [vmem:[#allocation10 + $0x168] sm:$0xff]
    %v2483 = vld [vmem:[#allocation10 + $0x170] sm:$0xff]
    %v2484 = vld [vmem:[#allocation10 + $0x178] sm:$0xff]
    %v2485 = vld [vmem:[#allocation10 + $0x180] sm:$0xff]
    %v2486 = vld [vmem:[#allocation10 + $0x188] sm:$0xff]
    %v2487 = vld [vmem:[#allocation10 + $0x190] sm:$0xff]
    %v2488 = vld [vmem:[#allocation10 + $0x198] sm:$0xff]
    %v2489 = vld [vmem:[#allocation10 + $0x1a0] sm:$0xff]
    %v2490 = vld [vmem:[#allocation10 + $0x1a8] sm:$0xff]
    %v2491 = vld [vmem:[#allocation10 + $0x1b0] sm:$0xff]
    %v2492 = vld [vmem:[#allocation10 + $0x1b8] sm:$0xff]
    %v2493 = vld [vmem:[#allocation10 + $0x1c0] sm:$0xff]
    %v2494 = vld [vmem:[#allocation10 + $0x1c8] sm:$0xff]
    %v2495 = vld [vmem:[#allocation10 + $0x1d0] sm:$0xff]
    %v2496 = vld [vmem:[#allocation10 + $0x1d8] sm:$0xff]
    %v2497 = vld [vmem:[#allocation10 + $0x1e0] sm:$0xff]
    %v2498 = vld [vmem:[#allocation10 + $0x1e8] sm:$0xff]
    %v2499 = vld [vmem:[#allocation10 + $0x1f0] sm:$0xff]
    %v2500 = vld [vmem:[#allocation10 + $0x1f8] sm:$0xff]
    %v2501 = vld [vmem:[%s7] sm:$0xf]
    %v2503 = vlaneseq
    %v2504 = vshrl.u32 %v2503, 7
    %v2505 = vsub.s32 0, %v2504
    %v2506 = vrot.slane %v2501, %v2505
    %v2507 = vlaneseq
    %v2508 = vshrl.u32 %v2507, 7
    %v2509 = vsub.s32 1, %v2508
    %v2510 = vrot.slane %v2501, %v2509
    %v2511 = vlaneseq
    %v2512 = vshrl.u32 %v2511, 7
    %v2513 = vsub.s32 2, %v2512
    %v2514 = vrot.slane %v2501, %v2513
    %v2515 = vlaneseq
    %v2516 = vshrl.u32 %v2515, 7
    %v2517 = vsub.s32 3, %v2516
    %v2518 = vrot.slane %v2501, %v2517
    %v2587 = vunpack.c.l.b16 %v2437
    %v2588 = vunpack.c.h.b16 %v2437
    %v2589 = vunpack.c.l.b16 %v2438
    %v2590 = vunpack.c.h.b16 %v2438
    %v2591 = vunpack.c.l.b16 %v2439
    %v2592 = vunpack.c.h.b16 %v2439
    %v2593 = vunpack.c.l.b16 %v2440
    %v2594 = vunpack.c.h.b16 %v2440
    %v2595 = vunpack.c.l.b16 %v2441
    %v2596 = vunpack.c.h.b16 %v2441
    %v2597 = vunpack.c.l.b16 %v2442
    %v2598 = vunpack.c.h.b16 %v2442
    %v2599 = vunpack.c.l.b16 %v2443
    %v2600 = vunpack.c.h.b16 %v2443
    %v2601 = vunpack.c.l.b16 %v2444
    %v2602 = vunpack.c.h.b16 %v2444
    %v2603 = vunpack.c.l.b16 %v2445
    %v2604 = vunpack.c.h.b16 %v2445
    %v2605 = vunpack.c.l.b16 %v2446
    %v2606 = vunpack.c.h.b16 %v2446
    %v2607 = vunpack.c.l.b16 %v2447
    %v2608 = vunpack.c.h.b16 %v2447
    %v2609 = vunpack.c.l.b16 %v2448
    %v2610 = vunpack.c.h.b16 %v2448
    %v2611 = vunpack.c.l.b16 %v2449
    %v2612 = vunpack.c.h.b16 %v2449
    %v2613 = vunpack.c.l.b16 %v2450
    %v2614 = vunpack.c.h.b16 %v2450
    %v2615 = vunpack.c.l.b16 %v2451
    %v2616 = vunpack.c.h.b16 %v2451
    %v2617 = vunpack.c.l.b16 %v2452
    %v2618 = vunpack.c.h.b16 %v2452
    %v2619 = vunpack.c.l.b16 %v2453
    %v2620 = vunpack.c.h.b16 %v2453
    %v2621 = vunpack.c.l.b16 %v2454
    %v2622 = vunpack.c.h.b16 %v2454
    %v2623 = vunpack.c.l.b16 %v2455
    %v2624 = vunpack.c.h.b16 %v2455
    %v2625 = vunpack.c.l.b16 %v2456
    %v2626 = vunpack.c.h.b16 %v2456
    %v2627 = vunpack.c.l.b16 %v2457
    %v2628 = vunpack.c.h.b16 %v2457
    %v2629 = vunpack.c.l.b16 %v2458
    %v2630 = vunpack.c.h.b16 %v2458
    %v2631 = vunpack.c.l.b16 %v2459
    %v2632 = vunpack.c.h.b16 %v2459
    %v2633 = vunpack.c.l.b16 %v2460
    %v2634 = vunpack.c.h.b16 %v2460
    %v2635 = vunpack.c.l.b16 %v2461
    %v2636 = vunpack.c.h.b16 %v2461
    %v2637 = vunpack.c.l.b16 %v2462
    %v2638 = vunpack.c.h.b16 %v2462
    %v2639 = vunpack.c.l.b16 %v2463
    %v2640 = vunpack.c.h.b16 %v2463
    %v2641 = vunpack.c.l.b16 %v2464
    %v2642 = vunpack.c.h.b16 %v2464
    %v2643 = vunpack.c.l.b16 %v2465
    %v2644 = vunpack.c.h.b16 %v2465
    %v2645 = vunpack.c.l.b16 %v2466
    %v2646 = vunpack.c.h.b16 %v2466
    %v2647 = vunpack.c.l.b16 %v2467
    %v2648 = vunpack.c.h.b16 %v2467
    %v2649 = vunpack.c.l.b16 %v2468
    %v2650 = vunpack.c.h.b16 %v2468
    %v2651 = vunpack.c.l.b16 %v2469
    %v2652 = vunpack.c.h.b16 %v2469
    %v2653 = vunpack.c.l.b16 %v2470
    %v2654 = vunpack.c.h.b16 %v2470
    %v2655 = vunpack.c.l.b16 %v2471
    %v2656 = vunpack.c.h.b16 %v2471
    %v2657 = vunpack.c.l.b16 %v2472
    %v2658 = vunpack.c.h.b16 %v2472
    %v2659 = vunpack.c.l.b16 %v2473
    %v2660 = vunpack.c.h.b16 %v2473
    %v2661 = vunpack.c.l.b16 %v2474
    %v2662 = vunpack.c.h.b16 %v2474
    %v2663 = vunpack.c.l.b16 %v2475
    %v2664 = vunpack.c.h.b16 %v2475
    %v2665 = vunpack.c.l.b16 %v2476
    %v2666 = vunpack.c.h.b16 %v2476
    %v2667 = vunpack.c.l.b16 %v2477
    %v2668 = vunpack.c.h.b16 %v2477
    %v2669 = vunpack.c.l.b16 %v2478
    %v2670 = vunpack.c.h.b16 %v2478
    %v2671 = vunpack.c.l.b16 %v2479
    %v2672 = vunpack.c.h.b16 %v2479
    %v2673 = vunpack.c.l.b16 %v2480
    %v2674 = vunpack.c.h.b16 %v2480
    %v2675 = vunpack.c.l.b16 %v2481
    %v2676 = vunpack.c.h.b16 %v2481
    %v2677 = vunpack.c.l.b16 %v2482
    %v2678 = vunpack.c.h.b16 %v2482
    %v2679 = vunpack.c.l.b16 %v2483
    %v2680 = vunpack.c.h.b16 %v2483
    %v2681 = vunpack.c.l.b16 %v2484
    %v2682 = vunpack.c.h.b16 %v2484
    %v2683 = vunpack.c.l.b16 %v2485
    %v2684 = vunpack.c.h.b16 %v2485
    %v2685 = vunpack.c.l.b16 %v2486
    %v2686 = vunpack.c.h.b16 %v2486
    %v2687 = vunpack.c.l.b16 %v2487
    %v2688 = vunpack.c.h.b16 %v2487
    %v2689 = vunpack.c.l.b16 %v2488
    %v2690 = vunpack.c.h.b16 %v2488
    %v2691 = vunpack.c.l.b16 %v2489
    %v2692 = vunpack.c.h.b16 %v2489
    %v2693 = vunpack.c.l.b16 %v2490
    %v2694 = vunpack.c.h.b16 %v2490
    %v2695 = vunpack.c.l.b16 %v2491
    %v2696 = vunpack.c.h.b16 %v2491
    %v2697 = vunpack.c.l.b16 %v2492
    %v2698 = vunpack.c.h.b16 %v2492
    %v2699 = vunpack.c.l.b16 %v2493
    %v2700 = vunpack.c.h.b16 %v2493
    %v2701 = vunpack.c.l.b16 %v2494
    %v2702 = vunpack.c.h.b16 %v2494
    %v2703 = vunpack.c.l.b16 %v2495
    %v2704 = vunpack.c.h.b16 %v2495
    %v2705 = vunpack.c.l.b16 %v2496
    %v2706 = vunpack.c.h.b16 %v2496
    %v2707 = vunpack.c.l.b16 %v2497
    %v2708 = vunpack.c.h.b16 %v2497
    %v2709 = vunpack.c.l.b16 %v2498
    %v2710 = vunpack.c.h.b16 %v2498
    %v2711 = vunpack.c.l.b16 %v2499
    %v2712 = vunpack.c.h.b16 %v2499
    %v2713 = vunpack.c.l.b16 %v2500
    %v2714 = vunpack.c.h.b16 %v2500
    %v2715 = vpack.c.b16 %v2591, %v2587
    %v2716 = vpack.c.b16 %v2592, %v2588
    %v2717 = vpack.c.b16 %v2593, %v2589
    %v2718 = vpack.c.b16 %v2594, %v2590
    %v2719 = vpack.c.b16 %v2599, %v2595
    %v2720 = vpack.c.b16 %v2600, %v2596
    %v2721 = vpack.c.b16 %v2601, %v2597
    %v2722 = vpack.c.b16 %v2602, %v2598
    %v2723 = vpack.c.b16 %v2607, %v2603
    %v2724 = vpack.c.b16 %v2608, %v2604
    %v2725 = vpack.c.b16 %v2609, %v2605
    %v2726 = vpack.c.b16 %v2610, %v2606
    %v2727 = vpack.c.b16 %v2615, %v2611
    %v2728 = vpack.c.b16 %v2616, %v2612
    %v2729 = vpack.c.b16 %v2617, %v2613
    %v2730 = vpack.c.b16 %v2618, %v2614
    %v2731 = vpack.c.b16 %v2623, %v2619
    %v2732 = vpack.c.b16 %v2624, %v2620
    %v2733 = vpack.c.b16 %v2625, %v2621
    %v2734 = vpack.c.b16 %v2626, %v2622
    %v2735 = vpack.c.b16 %v2631, %v2627
    %v2736 = vpack.c.b16 %v2632, %v2628
    %v2737 = vpack.c.b16 %v2633, %v2629
    %v2738 = vpack.c.b16 %v2634, %v2630
    %v2739 = vpack.c.b16 %v2639, %v2635
    %v2740 = vpack.c.b16 %v2640, %v2636
    %v2741 = vpack.c.b16 %v2641, %v2637
    %v2742 = vpack.c.b16 %v2642, %v2638
    %v2743 = vpack.c.b16 %v2647, %v2643
    %v2744 = vpack.c.b16 %v2648, %v2644
    %v2745 = vpack.c.b16 %v2649, %v2645
    %v2746 = vpack.c.b16 %v2650, %v2646
    %v2747 = vpack.c.b16 %v2655, %v2651
    %v2748 = vpack.c.b16 %v2656, %v2652
    %v2749 = vpack.c.b16 %v2657, %v2653
    %v2750 = vpack.c.b16 %v2658, %v2654
    %v2751 = vpack.c.b16 %v2663, %v2659
    %v2752 = vpack.c.b16 %v2664, %v2660
    %v2753 = vpack.c.b16 %v2665, %v2661
    %v2754 = vpack.c.b16 %v2666, %v2662
    %v2755 = vpack.c.b16 %v2671, %v2667
    %v2756 = vpack.c.b16 %v2672, %v2668
    %v2757 = vpack.c.b16 %v2673, %v2669
    %v2758 = vpack.c.b16 %v2674, %v2670
    %v2759 = vpack.c.b16 %v2679, %v2675
    %v2760 = vpack.c.b16 %v2680, %v2676
    %v2761 = vpack.c.b16 %v2681, %v2677
    %v2762 = vpack.c.b16 %v2682, %v2678
    %v2763 = vpack.c.b16 %v2687, %v2683
    %v2764 = vpack.c.b16 %v2688, %v2684
    %v2765 = vpack.c.b16 %v2689, %v2685
    %v2766 = vpack.c.b16 %v2690, %v2686
    %v2767 = vpack.c.b16 %v2695, %v2691
    %v2768 = vpack.c.b16 %v2696, %v2692
    %v2769 = vpack.c.b16 %v2697, %v2693
    %v2770 = vpack.c.b16 %v2698, %v2694
    %v2771 = vpack.c.b16 %v2703, %v2699
    %v2772 = vpack.c.b16 %v2704, %v2700
    %v2773 = vpack.c.b16 %v2705, %v2701
    %v2774 = vpack.c.b16 %v2706, %v2702
    %v2775 = vpack.c.b16 %v2711, %v2707
    %v2776 = vpack.c.b16 %v2712, %v2708
    %v2777 = vpack.c.b16 %v2713, %v2709
    %v2778 = vpack.c.b16 %v2714, %v2710
    %2843 = vmatprep.subr.bf16.mxu0 %v2744
    %2844 = vmatpush1.bf16.msra.mxu0 %v2743
    %2845 = vmatprep.subr.bf16.mxu0 %v2740
    %2846 = vmatpush1.bf16.msra.mxu0 %v2739
    %2847 = vmatprep.subr.bf16.mxu0 %v2736
    %2848 = vmatpush1.bf16.msra.mxu0 %v2735
    %2849 = vmatprep.subr.bf16.mxu0 %v2732
    %2850 = vmatpush1.bf16.msra.mxu0 %v2731
    %2851 = vmatprep.subr.bf16.mxu0 %v2728
    %2852 = vmatpush1.bf16.msra.mxu0 %v2727
    %2853 = vmatprep.subr.bf16.mxu0 %v2724
    %2854 = vmatpush1.bf16.msra.mxu0 %v2723
    %2855 = vmatprep.subr.bf16.mxu0 %v2720
    %2856 = vmatpush1.bf16.msra.mxu0 %v2719
    %2857 = vmatprep.subr.bf16.mxu0 %v2716
    %2858 = vmatpush1.bf16.msra.mxu0 %v2715
    %2859 = vmatprep.subr.bf16.mxu0 %v2776
    %2860 = vmatpush2.bf16.msra.mxu0 %v2775
    %2861 = vmatprep.subr.bf16.mxu0 %v2772
    %2862 = vmatpush2.bf16.msra.mxu0 %v2771
    %2863 = vmatprep.subr.bf16.mxu0 %v2768
    %2864 = vmatpush2.bf16.msra.mxu0 %v2767
    %2865 = vmatprep.subr.bf16.mxu0 %v2764
    %2866 = vmatpush2.bf16.msra.mxu0 %v2763
    %2867 = vmatprep.subr.bf16.mxu0 %v2760
    %2868 = vmatpush2.bf16.msra.mxu0 %v2759
    %2869 = vmatprep.subr.bf16.mxu0 %v2756
    %2870 = vmatpush2.bf16.msra.mxu0 %v2755
    %2871 = vmatprep.subr.bf16.mxu0 %v2752
    %2872 = vmatpush2.bf16.msra.mxu0 %v2751
    %2873 = vmatprep.subr.bf16.mxu0 %v2748
    %2874 = vmatpush2.bf16.msra.mxu0 %v2747
    %2875 = vmatprep.mubr.bf16.mxu0 %v2436
    %2876 = vmatmul.mubr.bf16.gmra.mxu0 %v2435
    %v2877 = vpop.f32.mrf.mxu0
    %v2878 = vadd.f32 %v2506, %v2877
    %v2879 = vpop.f32.mrf.mxu0
    %v2880 = vadd.f32 %v2510, %v2879
    %v2881 = vpop.f32.mrf.mxu0
    %v2882 = vpop.f32.mrf.mxu0
    %2883 = vdwg.mxu0
    %2884 = vmatprep.subr.bf16.mxu0 %v2746
    %2885 = vmatpush1.bf16.msra.mxu0 %v2745
    %2886 = vmatprep.subr.bf16.mxu0 %v2742
    %2887 = vmatpush1.bf16.msra.mxu0 %v2741
    %2888 = vmatprep.subr.bf16.mxu0 %v2738
    %2889 = vmatpush1.bf16.msra.mxu0 %v2737
    %2890 = vmatprep.subr.bf16.mxu0 %v2734
    %2891 = vmatpush1.bf16.msra.mxu0 %v2733
    %2892 = vmatprep.subr.bf16.mxu0 %v2730
    %2893 = vmatpush1.bf16.msra.mxu0 %v2729
    %2894 = vmatprep.subr.bf16.mxu0 %v2726
    %2895 = vmatpush1.bf16.msra.mxu0 %v2725
    %2896 = vmatprep.subr.bf16.mxu0 %v2722
    %2897 = vmatpush1.bf16.msra.mxu0 %v2721
    %2898 = vmatprep.subr.bf16.mxu0 %v2718
    %2899 = vmatpush1.bf16.msra.mxu0 %v2717
    %2900 = vmatprep.subr.bf16.mxu0 %v2778
    %2901 = vmatpush2.bf16.msra.mxu0 %v2777
    %2902 = vmatprep.subr.bf16.mxu0 %v2774
    %2903 = vmatpush2.bf16.msra.mxu0 %v2773
    %2904 = vmatprep.subr.bf16.mxu0 %v2770
    %2905 = vmatpush2.bf16.msra.mxu0 %v2769
    %2906 = vmatprep.subr.bf16.mxu0 %v2766
    %2907 = vmatpush2.bf16.msra.mxu0 %v2765
    %2908 = vmatprep.subr.bf16.mxu0 %v2762
    %2909 = vmatpush2.bf16.msra.mxu0 %v2761
    %2910 = vmatprep.subr.bf16.mxu0 %v2758
    %2911 = vmatpush2.bf16.msra.mxu0 %v2757
    %2912 = vmatprep.subr.bf16.mxu0 %v2754
    %2913 = vmatpush2.bf16.msra.mxu0 %v2753
    %2914 = vmatprep.subr.bf16.mxu0 %v2750
    %2915 = vmatpush2.bf16.msra.mxu0 %v2749
    %2916 = vmatprep.mubr.bf16.mxu0 %v2436
    %2917 = vmatmul.mubr.bf16.gmra.mxu0 %v2435
    %v2918 = vpop.f32.mrf.mxu0
    %v2919 = vadd.f32 %v2514, %v2918
    %v2920 = vpop.f32.mrf.mxu0
    %v2921 = vadd.f32 %v2518, %v2920
    %v2922 = vpop.f32.mrf.mxu0
    %v2923 = vpop.f32.mrf.mxu0
    %2924 = vdwg.mxu0
    %v2925 = vxor.u32 %v2878, 2147483648
    %v2926 = vmul.f32 %v2925, 1.442695
    %v2927 = vpow.pop %v2926
    %v2928 = vadd.f32 %v2927, 1.0
    %v2929 = vrcp.pop %v2928
    %v2930 = vmul.f32 1.0, %v2929
    %v2931 = vxor.u32 %v2880, 2147483648
    %v2932 = vmul.f32 %v2931, 1.442695
    %v2933 = vpow.pop %v2932
    %v2934 = vadd.f32 %v2933, 1.0
    %v2935 = vrcp.pop %v2934
    %v2936 = vmul.f32 1.0, %v2935
    %v2937 = vmul.f32 %v2930, %v2921
    %v2938 = vadd.f32 %v2919, %v2937
    %v2939 = vtanh.pop %v2938
    %v2940 = vsub.f32 1.0, %v2936
    %v2941 = vmul.f32 %v2940, %v2939
    %v2942 = vmul.f32 %v2936, %v2434
    %v2943 = vadd.f32 %v2941, %v2942
    %2944 = vst [vmem:[#allocation15] sm:$0x3] %v2943
    %v2945 = vpack.c.bf16 %v2943, %v2943
    %v2946 = vld [vmem:[#allocation11] sm:$0xf]
    %v2947 = vld [vmem:[#allocation11 + $0x4] sm:$0xf]
    %v2948 = vld [vmem:[#allocation11 + $0x8] sm:$0xf]
    %v2949 = vld [vmem:[#allocation11 + $0xc] sm:$0xf]
    %v2950 = vld [vmem:[#allocation11 + $0x10] sm:$0xf]
    %v2951 = vld [vmem:[#allocation11 + $0x14] sm:$0xf]
    %v2952 = vld [vmem:[#allocation11 + $0x18] sm:$0xf]
    %v2953 = vld [vmem:[#allocation11 + $0x1c] sm:$0xf]
    %v2954 = vld [vmem:[#allocation11 + $0x20] sm:$0xf]
    %v2955 = vld [vmem:[#allocation11 + $0x24] sm:$0xf]
    %v2956 = vld [vmem:[#allocation11 + $0x28] sm:$0xf]
    %v2957 = vld [vmem:[#allocation11 + $0x2c] sm:$0xf]
    %v2958 = vld [vmem:[#allocation11 + $0x30] sm:$0xf]
    %v2959 = vld [vmem:[#allocation11 + $0x34] sm:$0xf]
    %v2960 = vld [vmem:[#allocation11 + $0x38] sm:$0xf]
    %v2961 = vld [vmem:[#allocation11 + $0x3c] sm:$0xf]
    %v2962 = vld [vmem:[%s9] sm:$0x1]
    %v2964 = vlaneseq
    %v2965 = vshrl.u32 %v2964, 7
    %v2966 = vsub.s32 0, %v2965
    %v2967 = vrot.slane %v2962, %v2966
    %v2985 = vunpack.c.l.b16 %v2946
    %v2986 = vunpack.c.l.b16 %v2947
    %v2987 = vunpack.c.l.b16 %v2948
    %v2988 = vunpack.c.l.b16 %v2949
    %v2989 = vunpack.c.l.b16 %v2950
    %v2990 = vunpack.c.l.b16 %v2951
    %v2991 = vunpack.c.l.b16 %v2952
    %v2992 = vunpack.c.l.b16 %v2953
    %v2993 = vunpack.c.l.b16 %v2954
    %v2994 = vunpack.c.l.b16 %v2955
    %v2995 = vunpack.c.l.b16 %v2956
    %v2996 = vunpack.c.l.b16 %v2957
    %v2997 = vunpack.c.l.b16 %v2958
    %v2998 = vunpack.c.l.b16 %v2959
    %v2999 = vunpack.c.l.b16 %v2960
    %v3000 = vunpack.c.l.b16 %v2961
    %v3001 = vpack.c.b16 %v2986, %v2985
    %v3002 = vpack.c.b16 %v2988, %v2987
    %v3003 = vpack.c.b16 %v2990, %v2989
    %v3004 = vpack.c.b16 %v2992, %v2991
    %v3005 = vpack.c.b16 %v2994, %v2993
    %v3006 = vpack.c.b16 %v2996, %v2995
    %v3007 = vpack.c.b16 %v2998, %v2997
    %v3008 = vpack.c.b16 %v3000, %v2999
    %3017 = vmatprep.subr.bf16.mxu0 0
    %3018 = vmatpush1.bf16.msra.mxu0 %v3008
    %3019 = vmatprep.subr.bf16.mxu0 0
    %3020 = vmatpush1.bf16.msra.mxu0 %v3007
    %3021 = vmatprep.subr.bf16.mxu0 0
    %3022 = vmatpush1.bf16.msra.mxu0 %v3006
    %3023 = vmatprep.subr.bf16.mxu0 0
    %3024 = vmatpush1.bf16.msra.mxu0 %v3005
    %3025 = vmatprep.subr.bf16.mxu0 0
    %3026 = vmatpush1.bf16.msra.mxu0 %v3004
    %3027 = vmatprep.subr.bf16.mxu0 0
    %3028 = vmatpush1.bf16.msra.mxu0 %v3003
    %3029 = vmatprep.subr.bf16.mxu0 0
    %3030 = vmatpush1.bf16.msra.mxu0 %v3002
    %3031 = vmatprep.subr.bf16.mxu0 0
    %3032 = vmatpush1.bf16.msra.mxu0 %v3001
    %3033 = vmatprep.subr.bf16.mxu0 0
    %3034 = vmatpush2.bf16.msra.mxu0 0
    %3035 = vmatprep.subr.bf16.mxu0 0
    %3036 = vmatpush2.bf16.msra.mxu0 0
    %3037 = vmatprep.subr.bf16.mxu0 0
    %3038 = vmatpush2.bf16.msra.mxu0 0
    %3039 = vmatprep.subr.bf16.mxu0 0
    %3040 = vmatpush2.bf16.msra.mxu0 0
    %3041 = vmatprep.subr.bf16.mxu0 0
    %3042 = vmatpush2.bf16.msra.mxu0 0
    %3043 = vmatprep.subr.bf16.mxu0 0
    %3044 = vmatpush2.bf16.msra.mxu0 0
    %3045 = vmatprep.subr.bf16.mxu0 0
    %3046 = vmatpush2.bf16.msra.mxu0 0
    %3047 = vmatprep.subr.bf16.mxu0 0
    %3048 = vmatpush2.bf16.msra.mxu0 0
    %3049 = vmatprep.mubr.bf16.mxu0 0
    %3050 = vmatmul.mubr.bf16.gmra.mxu0 %v2945
    %v3051 = vpop.f32.mrf.mxu0
    %v3052 = vadd.f32 %v2967, %v3051
    %v3053 = vpop.f32.mrf.mxu0
    %v3054 = vpop.f32.mrf.mxu0
    %v3055 = vpop.f32.mrf.mxu0
    %3056 = vdwg.mxu0
    %v3057 = vmax.f32 %v3052, 0.0
    %v3058 = vpack.c.bf16 %v3057, %v3057
    %v3059 = vld [vmem:[#allocation13] sm:$0xf]
    %v3060 = vld [vmem:[#allocation13 + $0x4] sm:$0xf]
    %v3061 = vld [vmem:[#allocation13 + $0x8] sm:$0xf]
    %v3062 = vld [vmem:[#allocation13 + $0xc] sm:$0xf]
    %v3063 = vld [vmem:[#allocation13 + $0x10] sm:$0xf]
    %v3064 = vld [vmem:[#allocation13 + $0x14] sm:$0xf]
    %v3065 = vld [vmem:[#allocation13 + $0x18] sm:$0xf]
    %v3066 = vld [vmem:[#allocation13 + $0x1c] sm:$0xf]
    %v3067 = vld [vmem:[#allocation13 + $0x20] sm:$0xf]
    %v3068 = vld [vmem:[#allocation13 + $0x24] sm:$0xf]
    %v3069 = vld [vmem:[#allocation13 + $0x28] sm:$0xf]
    %v3070 = vld [vmem:[#allocation13 + $0x2c] sm:$0xf]
    %v3071 = vld [vmem:[#allocation13 + $0x30] sm:$0xf]
    %v3072 = vld [vmem:[#allocation13 + $0x34] sm:$0xf]
    %v3073 = vld [vmem:[#allocation13 + $0x38] sm:$0xf]
    %v3074 = vld [vmem:[#allocation13 + $0x3c] sm:$0xf]
    %v3075 = vld [vmem:[%s11] sm:$0x1]
    %v3077 = vlaneseq
    %v3078 = vshrl.u32 %v3077, 7
    %v3079 = vsub.s32 0, %v3078
    %v3080 = vrot.slane %v3075, %v3079
    %v3098 = vunpack.c.l.b16 %v3059
    %v3099 = vunpack.c.l.b16 %v3060
    %v3100 = vunpack.c.l.b16 %v3061
    %v3101 = vunpack.c.l.b16 %v3062
    %v3102 = vunpack.c.l.b16 %v3063
    %v3103 = vunpack.c.l.b16 %v3064
    %v3104 = vunpack.c.l.b16 %v3065
    %v3105 = vunpack.c.l.b16 %v3066
    %v3106 = vunpack.c.l.b16 %v3067
    %v3107 = vunpack.c.l.b16 %v3068
    %v3108 = vunpack.c.l.b16 %v3069
    %v3109 = vunpack.c.l.b16 %v3070
    %v3110 = vunpack.c.l.b16 %v3071
    %v3111 = vunpack.c.l.b16 %v3072
    %v3112 = vunpack.c.l.b16 %v3073
    %v3113 = vunpack.c.l.b16 %v3074
    %v3114 = vpack.c.b16 %v3099, %v3098
    %v3115 = vpack.c.b16 %v3101, %v3100
    %v3116 = vpack.c.b16 %v3103, %v3102
    %v3117 = vpack.c.b16 %v3105, %v3104
    %v3118 = vpack.c.b16 %v3107, %v3106
    %v3119 = vpack.c.b16 %v3109, %v3108
    %v3120 = vpack.c.b16 %v3111, %v3110
    %v3121 = vpack.c.b16 %v3113, %v3112
    %3130 = vmatprep.subr.bf16.mxu0 0
    %3131 = vmatpush1.bf16.msra.mxu0 %v3121
    %3132 = vmatprep.subr.bf16.mxu0 0
    %3133 = vmatpush1.bf16.msra.mxu0 %v3120
    %3134 = vmatprep.subr.bf16.mxu0 0
    %3135 = vmatpush1.bf16.msra.mxu0 %v3119
    %3136 = vmatprep.subr.bf16.mxu0 0
    %3137 = vmatpush1.bf16.msra.mxu0 %v3118
    %3138 = vmatprep.subr.bf16.mxu0 0
    %3139 = vmatpush1.bf16.msra.mxu0 %v3117
    %3140 = vmatprep.subr.bf16.mxu0 0
    %3141 = vmatpush1.bf16.msra.mxu0 %v3116
    %3142 = vmatprep.subr.bf16.mxu0 0
    %3143 = vmatpush1.bf16.msra.mxu0 %v3115
    %3144 = vmatprep.subr.bf16.mxu0 0
    %3145 = vmatpush1.bf16.msra.mxu0 %v3114
    %3146 = vmatprep.subr.bf16.mxu0 0
    %3147 = vmatpush2.bf16.msra.mxu0 0
    %3148 = vmatprep.subr.bf16.mxu0 0
    %3149 = vmatpush2.bf16.msra.mxu0 0
    %3150 = vmatprep.subr.bf16.mxu0 0
    %3151 = vmatpush2.bf16.msra.mxu0 0
    %3152 = vmatprep.subr.bf16.mxu0 0
    %3153 = vmatpush2.bf16.msra.mxu0 0
    %3154 = vmatprep.subr.bf16.mxu0 0
    %3155 = vmatpush2.bf16.msra.mxu0 0
    %3156 = vmatprep.subr.bf16.mxu0 0
    %3157 = vmatpush2.bf16.msra.mxu0 0
    %3158 = vmatprep.subr.bf16.mxu0 0
    %3159 = vmatpush2.bf16.msra.mxu0 0
    %3160 = vmatprep.subr.bf16.mxu0 0
    %3161 = vmatpush2.bf16.msra.mxu0 0
    %3162 = vmatprep.mubr.bf16.mxu0 0
    %3163 = vmatmul.mubr.bf16.gmra.mxu0 %v3058
    %v3164 = vpop.f32.mrf.mxu0
    %v3165 = vadd.f32 %v3080, %v3164
    %v3166 = vpop.f32.mrf.mxu0
    %v3167 = vpop.f32.mrf.mxu0
    %v3168 = vpop.f32.mrf.mxu0
    %3169 = vdwg.mxu0
    %3170 = vst [vmem:[#allocation14] sm:$0x3] %v3165
    // Predicated region
    $region78: #{tpu_custom_call.1} parent=1 // pred_check
      _
    $region79: #{tpu_custom_call.1} parent=1 // pred_check_branch
      %3172 = sbr.rel (0) target = $region81
    $region80: #{tpu_custom_call.1} parent=1 // pred_region
      %s3174 = ssub.s32 32, 32
      %3175 = vsyncadd [#allocation4], %s3174
      %s3177 = sshll.u32 [#allocation14], 4
      %s3178 = int_to_ptr.vmem [resolvable:$true] %s3177
      %3180 = dma.vmem_to_hbm [thread:$0]  %s3178, 32, %s12, [#allocation4]
    $region81: #{tpu_custom_call.1} parent=1 // pred_fallthru
      _
    // Predicated region
    $region82: #{tpu_custom_call.1} parent=1 // pred_check
      _
    $region83: #{tpu_custom_call.1} parent=1 // pred_check_branch
      %3182 = sbr.rel (0) target = $region85
    $region84: #{tpu_custom_call.1} parent=1 // pred_region
      %s3184 = ssub.s32 32, 32
      %3185 = vsyncadd [#allocation16], %s3184
      %s3187 = sshll.u32 [#allocation15], 4
      %s3188 = int_to_ptr.vmem [resolvable:$true] %s3187
      %3190 = dma.vmem_to_hbm [thread:$0]  %s3188, 32, %s13, [#allocation16]
    $region85: #{tpu_custom_call.1} parent=1 // pred_fallthru
      _
    // Predicated region
    $region86: #{tpu_custom_call.1} parent=1 // pred_check
      _
    $region87: #{tpu_custom_call.1} parent=1 // pred_check_branch
      %3192 = sbr.rel (0) target = $region89
    $region88: #{tpu_custom_call.1} parent=1 // pred_region
      %3193 = dma.done [#allocation4], 32
    $region89: #{tpu_custom_call.1} parent=1 // pred_fallthru
      _
    // Predicated region
    $region90: #{tpu_custom_call.1} parent=1 // pred_check
      _
    $region91: #{tpu_custom_call.1} parent=1 // pred_check_branch
      %3195 = sbr.rel (0) target = $region93
    $region92: #{tpu_custom_call.1} parent=1 // pred_region
      %3196 = dma.done [#allocation16], 32
    $region93: #{tpu_custom_call.1} parent=1 // pred_fallthru
      _
    %3197 = vsyncpa [#allocation3], 1
    %3198 = vsyncpa [#allocation6], 1
    %3199 = vsyncpa [#allocation9], 1
    %3200 = vsyncpa [#allocation12], 1
    %3201 = vsyncpa [#allocation4], 1
    %3202 = vsyncpa [#allocation16], 1

</llo_original>
